<compile_context>
chip_gen: v6e
topology: v6e:2x2x1
jax: 0.10.0
libtpu: 0.0.40
codegen_flags: <defaults>
</compile_context>

<pallas_src>
import functools

import jax
import jax.numpy as jnp
from jax import lax
from jax.experimental import pallas as pl
from jax.experimental.pallas import tpu as pltpu

EPS = 1e-6              # torch F.pairwise_distance default eps (added to the difference)
_LANES = 128
_ACC_ROWS = 8           # each core's accumulator slab is one (8, 128) f32 vreg
_MAX_TILE_ROWS = 16384  # DMA-tile cap
_MAX_CHUNK_ROWS = 1024  # compute-chunk cap (bounds in-kernel f32 temporaries)


def _round_up(x, m):
    return (x + m - 1) // m * m


def _sublane_multiple(itemsize):
    # native second-minor tiling: 8 rows for 4-byte, 16 for 2-byte, 32 for 1-byte dtypes
    return max(8, 32 // int(itemsize))


def _num_tensorcores():
    """TensorCores one pallas_call can shard a `parallel` grid axis over."""
    try:
        kind = jax.devices()[0].device_kind.lower()
    except Exception:
        return 2
    # Single-TensorCore generations (and v2/v3, which expose one core per device).
    if any(t in kind for t in ("v2", "v3", "v5 lite", "v5e", "v6 lite", "v6e")):
        return 1
    # v4 / v5p megacore and v7x: two TensorCores per device.
    return 2


def _vmem_limit_bytes():
    try:
        phys = int(pltpu.get_tpu_info().vmem_capacity_bytes)
    except Exception:
        phys = 64 * 1024 * 1024          # conservative (v7x-sized) fallback
    # v5e/v6e: 128 MiB physical VMEM -> 96 MiB scoped limit; v7x: 64 MiB -> 48 MiB.
    return min(phys * 3 // 4, 96 * 1024 * 1024)


def _choose_chunk_rows(feat, mult):
    """Compute-chunk height: keep one (chunk, feat) f32 temporary around ~512 KiB."""
    target = (512 * 1024) // (4 * feat)
    return max(mult, min(_MAX_CHUNK_ROWS, (target // mult) * mult))


def _choose_tile_rows(batch, feat, in_itemsize, lab_itemsize, mult, chunk, vmem_limit):
    batch_cap = _round_up(batch, mult)
    if batch_cap <= chunk:
        return batch_cap                          # whole batch fits in one chunk-sized tile
    # Tile-proportional VMEM: 2 inputs x 2 pipeline buffers, plus the (rows, 1) label block
    # which lane-pads to (rows, 128) in VMEM (x 2 buffers).
    bytes_per_row = 2 * 2 * feat * in_itemsize + 2 * _LANES * lab_itemsize
    # Chunk-proportional VMEM: f32 temporaries of one compute chunk plus the MXU ones operand.
    chunk_scratch = chunk * 4 * (4 * feat + 8 * _LANES) + feat * _LANES * 4
    budget = (vmem_limit * 3) // 4 - chunk_scratch
    tr = min(budget // bytes_per_row, _MAX_TILE_ROWS, _round_up(batch, chunk))
    return max(chunk, tr - tr % chunk)


def _contrastive_loss_kernel(x1_ref, x2_ref, lab_ref, out_ref, *,
                             tile_rows, chunk_rows, batch, feat, margin,
                             num_full_tiles, num_logical_tiles):
    o = pl.program_id(0)                       # TensorCore slot ("parallel")
    i = pl.program_id(1)                       # reduction step ("arbitrary")
    tile_id = o * pl.num_programs(1) + i       # UNCLAMPED logical tile index

    @pl.when(i == 0)
    def _init():
        out_ref[...] = jnp.zeros_like(out_ref)

    n_chunks = tile_rows // chunk_rows
    # Lane-replicated ones: routes the D-axis reduce through the (otherwise idle) MXU instead
    # of the XLU.  Every output lane carries the same d^2; fixed up by an exact 1/128 rescale.
    ones_mat = jnp.ones((feat, _LANES), jnp.float32)

    def tile_loss_sum(mask_rows):
        def chunk_body(c, acc):
            r0 = pl.multiple_of(c * chunk_rows, chunk_rows)
            x1 = x1_ref[pl.ds(r0, chunk_rows), :].astype(jnp.float32)
            x2 = x2_ref[pl.ds(r0, chunk_rows), :].astype(jnp.float32)
            lab = lab_ref[pl.ds(r0, chunk_rows), :].astype(jnp.float32)
            diff = x1 - x2 + EPS                      # torch adds eps to the difference
            sq = diff * diff
            # d^2 replicated across 128 lanes; full-f32-precision MXU passes.
            d2 = jnp.dot(sq, ones_mat,
                         preferred_element_type=jnp.float32,
                         precision=jax.lax.Precision.HIGHEST)
            d = jnp.sqrt(d2)                          # EUP slot
            hinge = jnp.maximum(margin - d, 0.0)
            # (1-lab)*d2 + lab*hinge^2  ==  d2 + lab*(hinge^2 - d2)
            loss = d2 + lab * (hinge * hinge - d2)
            if mask_rows:
                row = (tile_id * tile_rows + r0
                       + lax.broadcasted_iota(jnp.int32, (chunk_rows, 1), 0))
                loss = jnp.where(row < batch, loss, 0.0)
            return acc + jnp.sum(loss)
        return lax.fori_loop(0, n_chunks, chunk_body, jnp.float32(0.0))

    inv_lanes = jnp.float32(1.0 / _LANES)             # exact power-of-two rescale

    def accumulate(mask_rows):
        # Single slab read-modify-write per tile; per-chunk partials ride in the loop carry.
        out_ref[...] += tile_loss_sum(mask_rows) * inv_lanes

    if num_full_tiles >= num_logical_tiles:
        accumulate(False)                              # every tile fully inside the batch
    else:
        if num_full_tiles > 0:
            pl.when(tile_id < num_full_tiles)(lambda: accumulate(False))
        # Partial last tile and (clamped-DMA) phantom tiles: the row mask zeroes rows >= B.
        pl.when(tile_id >= num_full_tiles)(lambda: accumulate(True))


def contrastive_loss(output1, output2, label, *, margin=2.0, tile_rows=None, num_cores=None):
    B, D = output1.shape
    assert output2.shape == (B, D)
    # Contrastive labels are {0,1}: exact in bf16.  The (rows,1) label block lane-pads to
    # (rows,128) in VMEM, so the narrower dtype halves its footprint (=> larger input tiles).
    label = jnp.reshape(label, (B, 1)).astype(jnp.bfloat16)

    in_itemsize = jnp.dtype(output1.dtype).itemsize
    lab_itemsize = jnp.dtype(label.dtype).itemsize
    mult = max(_sublane_multiple(in_itemsize), _sublane_multiple(lab_itemsize))

    vmem_limit = _vmem_limit_bytes()
    chunk_rows = _choose_chunk_rows(D, mult)
    if tile_rows is None:
        tile_rows = _choose_tile_rows(B, D, in_itemsize, lab_itemsize, mult,
                                      chunk_rows, vmem_limit)
    else:
        tile_rows = int(tile_rows)
        assert tile_rows > 0 and tile_rows % mult == 0, (tile_rows, mult)
    if tile_rows % chunk_rows != 0:
        chunk_rows = tile_rows                 # single compute chunk per tile

    num_tiles = pl.cdiv(B, tile_rows)
    NC = _num_tensorcores() if num_cores is None else int(num_cores)
    NC = max(1, min(NC, num_tiles))            # never more cores than tiles
    num_inner = pl.cdiv(num_tiles, NC)
    num_logical = NC * num_inner
    num_full = B // tile_rows

    def x_map(o, i):
        # Clamp so phantom tiles (num_logical > num_tiles) DMA an in-bounds block; their
        # contribution is zeroed by the in-kernel row mask (which uses the unclamped tile id).
        return (jnp.minimum(o * num_inner + i, num_tiles - 1), 0)

    kernel = functools.partial(
        _contrastive_loss_kernel,
        tile_rows=tile_rows, chunk_rows=chunk_rows, batch=B, feat=D,
        margin=float(margin), num_full_tiles=num_full, num_logical_tiles=num_logical)

    out = pl.pallas_call(
        kernel,
        out_shape=jax.ShapeDtypeStruct((NC * _ACC_ROWS, _LANES), jnp.float32),
        grid=(NC, num_inner),
        in_specs=[
            # TODO(synk): if xprof still shows exposed DMA on v7x after the larger tiles, add
            # pipeline_mode=pl.Buffered(3) to these two input specs (inputs only).
            pl.BlockSpec((tile_rows, D), x_map),
            pl.BlockSpec((tile_rows, D), x_map),
            pl.BlockSpec((tile_rows, 1), x_map),
        ],
        out_specs=pl.BlockSpec((_ACC_ROWS, _LANES), lambda o, i: (o, 0)),
        compiler_params=pltpu.CompilerParams(
            dimension_semantics=("parallel", "arbitrary"),
            vmem_limit_bytes=vmem_limit,
        ),
        cost_estimate=pl.CostEstimate(
            flops=int(5 * B * D + 16 * B),
            transcendentals=B,
            bytes_accessed=int(2 * B * D * in_itemsize + B * lab_itemsize
                               + NC * _ACC_ROWS * _LANES * 4),
        ),
    )(output1, output2, label)

    # Every element of core o's slab equals that core's partial sum; combine + mean.
    partial = out[::_ACC_ROWS, 0]              # (NC,)
    return jnp.sum(partial) / B


def _reference(output1, output2, label, margin=2.0):
    diff = output1.astype(jnp.float32) - output2.astype(jnp.float32) + EPS
    d = jnp.sqrt(jnp.sum(diff * diff, axis=-1, keepdims=True))
    lab = jnp.reshape(label, (-1, 1)).astype(jnp.float32)
    return jnp.mean((1.0 - lab) * d ** 2 + lab * jnp.square(jnp.maximum(margin - d, 0.0)))


if __name__ == "__main__":
    key = jax.random.PRNGKey(0)
    k1, k2, k3 = jax.random.split(key, 3)

    # Small shapes; B chosen non-multiple-of-tile to exercise tiling + masking.
    B, D = 36, 128
    output1 = jax.random.normal(k1, (B, D), dtype=jnp.float32)
    output2 = jax.random.normal(k2, (B, D), dtype=jnp.float32)
    label = jax.random.bernoulli(k3, p=0.5, shape=(B, 1)).astype(jnp.float32)

    ref = _reference(output1, output2, label)

    # 1) Tiny tiles + forced 2-core split: exercises multi-tile accumulation, the partial
    #    last tile, a phantom tile (clamped DMA) and both per-core output slabs.
    loss_small = jax.block_until_ready(
        contrastive_loss(output1, output2, label, tile_rows=16, num_cores=2))
    assert jnp.allclose(loss_small, ref, rtol=1e-4, atol=1e-4), (loss_small, ref)

    # 2) Default path: auto (generation-aware) tile size and core count.
    loss_auto = jax.block_until_ready(contrastive_loss(output1, output2, label))
    assert jnp.allclose(loss_auto, ref, rtol=1e-4, atol=1e-4), (loss_auto, ref)

    # 3) bf16 inputs (recommended production dtype: half the HBM traffic), f32 math inside.
    o1b, o2b = output1.astype(jnp.bfloat16), output2.astype(jnp.bfloat16)
    ref_b = _reference(o1b.astype(jnp.float32), o2b.astype(jnp.float32), label)
    loss_b = jax.block_until_ready(contrastive_loss(o1b, o2b, label))
    assert jnp.allclose(loss_b, ref_b, rtol=1e-4, atol=1e-4), (loss_b, ref_b)

    print("KERNEL_OK")
</pallas_src>

<mosaic_0001>
module attributes {stable_mosaic.version = 11 : i64} {
  func.func @_contrastive_loss_kernel(%arg0: i32, %arg1: i32, %arg2: memref<16x128xf32, #tpu.memory_space<vmem>>, %arg3: memref<16x128xf32, #tpu.memory_space<vmem>>, %arg4: memref<16x1xbf16, #tpu.memory_space<vmem>>, %arg5: memref<8x128xf32, #tpu.memory_space<vmem>>) attributes {dimension_semantics = [#tpu.dimension_semantics<parallel>, #tpu.dimension_semantics<arbitrary>], iteration_bounds = array<i64: 2, 2>, scalar_prefetch = 0 : i64, scratch_operands = 0 : i64, tpu.core_type = #tpu.core_type<tc>, window_params = [{transform_indices = @transform_0, window_bounds = array<i64: 16, 128>}, {transform_indices = @transform_1, window_bounds = array<i64: 16, 128>}, {transform_indices = @transform_2, window_bounds = array<i64: 16, 1>}, {transform_indices = @transform_3, window_bounds = array<i64: 8, 128>}]} {
    %c2_i32 = arith.constant 2 : i32
    %0 = arith.muli %arg0, %c2_i32 : i32
    %1 = arith.addi %0, %arg1 : i32
    %c0_i32 = arith.constant 0 : i32
    %2 = arith.cmpi eq, %arg1, %c0_i32 : i32
    %3 = arith.extui %2 : i1 to i32
    %c0_i32_0 = arith.constant 0 : i32
    %4 = arith.cmpi ne, %3, %c0_i32_0 : i32
    scf.if %4 {
      %cst_7 = arith.constant 0.000000e+00 : f32
      %12 = vector.broadcast %cst_7 : f32 to vector<8x128xf32>
      %c0 = arith.constant 0 : index
      %c0_8 = arith.constant 0 : index
      %13 = vector.load %arg5[%c0, %c0_8] : memref<8x128xf32, #tpu.memory_space<vmem>>, vector<8x128xf32>
      tpu.vector_store %arg5[%c0, %c0_8], %12 {strides = array<i32>} : memref<8x128xf32, #tpu.memory_space<vmem>>, vector<8x128xf32>,
    } else {
    }
    %cst = arith.constant 1.000000e+00 : f32
    %5 = vector.broadcast %cst : f32 to vector<128x128xf32>
    %c2_i32_1 = arith.constant 2 : i32
    %6 = arith.cmpi slt, %1, %c2_i32_1 : i32
    %7 = arith.extui %6 : i1 to i32
    %cst_2 = arith.constant 7.812500e-03 : f32
    %c0_i32_3 = arith.constant 0 : i32
    %8 = arith.cmpi ne, %7, %c0_i32_3 : i32
    scf.if %8 {
      %c0 = arith.constant 0 : index
      %c0_7 = arith.constant 0 : index
      %12 = vector.load %arg5[%c0, %c0_7] : memref<8x128xf32, #tpu.memory_space<vmem>>, vector<8x128xf32>
      %cst_8 = arith.constant 0.000000e+00 : f32
      %c0_i32_9 = arith.constant 0 : i32
      %c16_i32 = arith.constant 16 : i32
      %13 = arith.muli %c0_i32_9, %c16_i32 : i32
      %14 = tpu.assume_multiple %13, 16 : i32
      %15 = arith.index_cast %14 : i32 to index
      %c0_10 = arith.constant 0 : index
      %16 = vector.load %arg2[%15, %c0_10] : memref<16x128xf32, #tpu.memory_space<vmem>>, vector<16x128xf32>
      %17 = arith.index_cast %14 : i32 to index
      %c0_11 = arith.constant 0 : index
      %18 = vector.load %arg3[%17, %c0_11] : memref<16x128xf32, #tpu.memory_space<vmem>>, vector<16x128xf32>
      %19 = arith.index_cast %14 : i32 to index
      %c0_12 = arith.constant 0 : index
      %20 = vector.load %arg4[%19, %c0_12] : memref<16x1xbf16, #tpu.memory_space<vmem>>, vector<16x1xbf16>
      %21 = arith.extf %20 : vector<16x1xbf16> to vector<16x1xf32>
      %22 = arith.subf %16, %18 : vector<16x128xf32>
      %cst_13 = arith.constant 9.99999997E-7 : f32
      %23 = vector.broadcast %cst_13 : f32 to vector<16x128xf32>
      %24 = arith.addf %22, %23 : vector<16x128xf32>
      %25 = arith.mulf %24, %24 : vector<16x128xf32>
      %cst_14 = arith.constant dense<0.000000e+00> : vector<16x128xf32>
      %26 = tpu.matmul %25, %5, %cst_14 {dimension_numbers = #tpu.dot_dimension_numbers<[1], [0], [0], [1], [0, 0, 1, 1], [], []>, precision = #tpu.contract_precision<fp32>} : vector<16x128xf32>, vector<128x128xf32>, vector<16x128xf32> -> vector<16x128xf32>
      %27 = math.sqrt %26 : vector<16x128xf32>
      %cst_15 = arith.constant 2.000000e+00 : f32
      %28 = vector.broadcast %cst_15 : f32 to vector<16x128xf32>
      %29 = arith.subf %28, %27 : vector<16x128xf32>
      %cst_16 = arith.constant 0.000000e+00 : f32
      %30 = vector.broadcast %cst_16 : f32 to vector<16x128xf32>
      %31 = arith.maximumf %29, %30 : vector<16x128xf32>
      %32 = arith.mulf %31, %31 : vector<16x128xf32>
      %33 = arith.subf %32, %26 : vector<16x128xf32>
      %34 = vector.broadcast %21 : vector<16x1xf32> to vector<16x128xf32>
      %35 = arith.mulf %34, %33 : vector<16x128xf32>
      %36 = arith.addf %26, %35 : vector<16x128xf32>
      %37 = vector.shape_cast %36 : vector<16x128xf32> to vector<1x16x128xf32>
      %cst_17 = arith.constant dense<0.000000e+00> : vector<1xf32>
      %38 = vector.multi_reduction <add>, %37, %cst_17 [1, 2] : vector<1x16x128xf32> to vector<1xf32>
      %39 = vector.shape_cast %38 : vector<1xf32> to vector<1x1x1xf32>
      %40 = vector.extract %39[0, 0, 0] : f32 from vector<1x1x1xf32>
      %41 = arith.addf %cst_8, %40 : f32
      %c1_i32 = arith.constant 1 : i32
      %42 = arith.mulf %41, %cst_2 : f32
      %43 = vector.broadcast %42 : f32 to vector<8x128xf32>
      %44 = arith.addf %12, %43 : vector<8x128xf32>
      %c0_18 = arith.constant 0 : index
      %c0_19 = arith.constant 0 : index
      %45 = vector.load %arg5[%c0_18, %c0_19] : memref<8x128xf32, #tpu.memory_space<vmem>>, vector<8x128xf32>
      tpu.vector_store %arg5[%c0_18, %c0_19], %44 {strides = array<i32>} : memref<8x128xf32, #tpu.memory_space<vmem>>, vector<8x128xf32>,
    } else {
    }
    %c2_i32_4 = arith.constant 2 : i32
    %9 = arith.cmpi sge, %1, %c2_i32_4 : i32
    %10 = arith.extui %9 : i1 to i32
    %cst_5 = arith.constant 7.812500e-03 : f32
    %c0_i32_6 = arith.constant 0 : i32
    %11 = arith.cmpi ne, %10, %c0_i32_6 : i32
    scf.if %11 {
      %c0 = arith.constant 0 : index
      %c0_7 = arith.constant 0 : index
      %12 = vector.load %arg5[%c0, %c0_7] : memref<8x128xf32, #tpu.memory_space<vmem>>, vector<8x128xf32>
      %cst_8 = arith.constant 0.000000e+00 : f32
      %c0_i32_9 = arith.constant 0 : i32
      %c16_i32 = arith.constant 16 : i32
      %13 = arith.muli %c0_i32_9, %c16_i32 : i32
      %14 = tpu.assume_multiple %13, 16 : i32
      %15 = arith.index_cast %14 : i32 to index
      %c0_10 = arith.constant 0 : index
      %16 = vector.load %arg2[%15, %c0_10] : memref<16x128xf32, #tpu.memory_space<vmem>>, vector<16x128xf32>
      %17 = arith.index_cast %14 : i32 to index
      %c0_11 = arith.constant 0 : index
      %18 = vector.load %arg3[%17, %c0_11] : memref<16x128xf32, #tpu.memory_space<vmem>>, vector<16x128xf32>
      %19 = arith.index_cast %14 : i32 to index
      %c0_12 = arith.constant 0 : index
      %20 = vector.load %arg4[%19, %c0_12] : memref<16x1xbf16, #tpu.memory_space<vmem>>, vector<16x1xbf16>
      %21 = arith.extf %20 : vector<16x1xbf16> to vector<16x1xf32>
      %22 = arith.subf %16, %18 : vector<16x128xf32>
      %cst_13 = arith.constant 9.99999997E-7 : f32
      %23 = vector.broadcast %cst_13 : f32 to vector<16x128xf32>
      %24 = arith.addf %22, %23 : vector<16x128xf32>
      %25 = arith.mulf %24, %24 : vector<16x128xf32>
      %cst_14 = arith.constant dense<0.000000e+00> : vector<16x128xf32>
      %26 = tpu.matmul %25, %5, %cst_14 {dimension_numbers = #tpu.dot_dimension_numbers<[1], [0], [0], [1], [0, 0, 1, 1], [], []>, precision = #tpu.contract_precision<fp32>} : vector<16x128xf32>, vector<128x128xf32>, vector<16x128xf32> -> vector<16x128xf32>
      %27 = math.sqrt %26 : vector<16x128xf32>
      %cst_15 = arith.constant 2.000000e+00 : f32
      %28 = vector.broadcast %cst_15 : f32 to vector<16x128xf32>
      %29 = arith.subf %28, %27 : vector<16x128xf32>
      %cst_16 = arith.constant 0.000000e+00 : f32
      %30 = vector.broadcast %cst_16 : f32 to vector<16x128xf32>
      %31 = arith.maximumf %29, %30 : vector<16x128xf32>
      %32 = arith.mulf %31, %31 : vector<16x128xf32>
      %33 = arith.subf %32, %26 : vector<16x128xf32>
      %34 = vector.broadcast %21 : vector<16x1xf32> to vector<16x128xf32>
      %35 = arith.mulf %34, %33 : vector<16x128xf32>
      %36 = arith.addf %26, %35 : vector<16x128xf32>
      %c16_i32_17 = arith.constant 16 : i32
      %37 = arith.muli %1, %c16_i32_17 : i32
      %38 = arith.addi %37, %14 : i32
      %39 = tpu.iota {dimensions = array<i32: 0>} : vector<16x1xi32>
      %40 = vector.broadcast %38 : i32 to vector<16x1xi32>
      %41 = arith.addi %40, %39 : vector<16x1xi32>
      %c36_i32 = arith.constant 36 : i32
      %42 = vector.broadcast %c36_i32 : i32 to vector<16x1xi32>
      %43 = arith.cmpi slt, %41, %42 : vector<16x1xi32>
      %cst_18 = arith.constant 0.000000e+00 : f32
      %44 = vector.shape_cast %43 : vector<16x1xi1> to vector<16x1xi1>
      %45 = vector.broadcast %44 : vector<16x1xi1> to vector<16x128xi1>
      %46 = vector.broadcast %cst_18 : f32 to vector<16x128xf32>
      %47 = arith.select %45, %36, %46 : vector<16x128xi1>, vector<16x128xf32>
      %48 = vector.shape_cast %47 : vector<16x128xf32> to vector<1x16x128xf32>
      %cst_19 = arith.constant dense<0.000000e+00> : vector<1xf32>
      %49 = vector.multi_reduction <add>, %48, %cst_19 [1, 2] : vector<1x16x128xf32> to vector<1xf32>
      %50 = vector.shape_cast %49 : vector<1xf32> to vector<1x1x1xf32>
      %51 = vector.extract %50[0, 0, 0] : f32 from vector<1x1x1xf32>
      %52 = arith.addf %cst_8, %51 : f32
      %c1_i32 = arith.constant 1 : i32
      %53 = arith.mulf %52, %cst_5 : f32
      %54 = vector.broadcast %53 : f32 to vector<8x128xf32>
      %55 = arith.addf %12, %54 : vector<8x128xf32>
      %c0_20 = arith.constant 0 : index
      %c0_21 = arith.constant 0 : index
      %56 = vector.load %arg5[%c0_20, %c0_21] : memref<8x128xf32, #tpu.memory_space<vmem>>, vector<8x128xf32>
      tpu.vector_store %arg5[%c0_20, %c0_21], %55 {strides = array<i32>} : memref<8x128xf32, #tpu.memory_space<vmem>>, vector<8x128xf32>,
    } else {
    }
    return
  }
  func.func @transform_0(%arg0: i32, %arg1: i32) -> (i32, i32) {
    %c2_i32 = arith.constant 2 : i32
    %0 = arith.muli %arg0, %c2_i32 : i32
    %1 = arith.addi %0, %arg1 : i32
    %c2_i32_0 = arith.constant 2 : i32
    %2 = arith.minsi %1, %c2_i32_0 : i32
    %c0_i32 = arith.constant 0 : i32
    %c0_i32_1 = arith.constant 0 : i32
    return %2, %c0_i32 : i32, i32
  }
  func.func @transform_1(%arg0: i32, %arg1: i32) -> (i32, i32) {
    %c2_i32 = arith.constant 2 : i32
    %0 = arith.muli %arg0, %c2_i32 : i32
    %1 = arith.addi %0, %arg1 : i32
    %c2_i32_0 = arith.constant 2 : i32
    %2 = arith.minsi %1, %c2_i32_0 : i32
    %c0_i32 = arith.constant 0 : i32
    %c0_i32_1 = arith.constant 0 : i32
    return %2, %c0_i32 : i32, i32
  }
  func.func @transform_2(%arg0: i32, %arg1: i32) -> (i32, i32) {
    %c2_i32 = arith.constant 2 : i32
    %0 = arith.muli %arg0, %c2_i32 : i32
    %1 = arith.addi %0, %arg1 : i32
    %c2_i32_0 = arith.constant 2 : i32
    %2 = arith.minsi %1, %c2_i32_0 : i32
    %c0_i32 = arith.constant 0 : i32
    %c0_i32_1 = arith.constant 0 : i32
    return %2, %c0_i32 : i32, i32
  }
  func.func @transform_3(%arg0: i32, %arg1: i32) -> (i32, i32) {
    %c0_i32 = arith.constant 0 : i32
    %c0_i32_0 = arith.constant 0 : i32
    return %arg0, %c0_i32 : i32, i32
  }
}

</mosaic_0001>

<llo_original>
// kernel: tpu_custom_call.1
$region0: #{tpu_custom_call.1}
  #allocation0 [shape = 'u32[]', space=smem, size = 0x4, offset = 0x4, fixed_abs, tag = 'smem constant byte address 0x4 - core index']
  #allocation1 [shape = 'u32[144,128]{1,0:T(1,128)}', space=vmem, size = 0x12000, scoped, tag = 'internal scratch']
  %s0 = inlined_call_operand.hbm [shape: f32[36,128], index: 0, kind: input, shape index: {}]
  %s1 = inlined_call_operand.hbm [shape: f32[36,128], index: 1, kind: input, shape index: {}]
  %s2 = inlined_call_operand.vmem [shape: bf16[36,1], index: 2, kind: input, shape index: {}]
  %s3 = inlined_call_operand.hbm [shape: f32[16,128], index: 3, kind: output, shape index: {}]
  %s4 = sld [smem:[#allocation0]]
  $region65: #{tpu_custom_call.1} parent=0
    _
  %s6 = ssub.s32 1, %s4
  %s7 = scalar_select 0, %s6, %s4
  $region1: #{tpu_custom_call.1} parent=0
    #allocation2 [shape = 'u8[16384]{0}', space=vmem, size = 0x4000, scoped, tag = 'input window, operand 0']
    #allocation3 [shape = 's32[2]{0}', space=sflag, size = 0x8, scoped, tag = 'scoped memory for tpu_custom_call.1']
    #allocation4 [shape = 's32[2]{0}', space=sflag, size = 0x8, scoped, tag = 'scoped memory for tpu_custom_call.1']
    #allocation5 [shape = 'u8[16384]{0}', space=vmem, size = 0x4000, scoped, tag = 'input window, operand 1']
    #allocation6 [shape = 's32[2]{0}', space=sflag, size = 0x8, scoped, tag = 'scoped memory for tpu_custom_call.1']
    #allocation7 [shape = 'u8[8192]{0}', space=vmem, size = 0x2000, scoped, tag = 'output window, operand 0']
    %8 = vsyncpa [#allocation3], 0
    %s9 = scalar_lea.sflag [#allocation3], 1
    %10 = vsyncpa %s9, 0
    %11 = vsyncpa [#allocation6], 0
    %s12 = scalar_lea.sflag [#allocation6], 1
    %13 = vsyncpa %s12, 0
    %14 = vsyncpa [#allocation4], 0
    %s15 = scalar_lea.sflag [#allocation4], 1
    %16 = vsyncpa %s15, 0
    loop: start=0, step=1, limit=6
    $region2: #{tpu_custom_call.1} parent=1 // loop_pre_header
      _
    $region3: #{tpu_custom_call.1} parent=1 // loop_header
      %s18 = sphi 0, %s22
      %p19 = scmp.ge.s32.totalorder %s18, 6
      %s25 = sphi 0, %s37
      %s26 = sphi 0, %s33
      %s27 = sphi 0, %s25
      %s28 = sphi 0, %s26
      %s29 = sphi 0, %s27
      %s30 = sphi 0, %s28
      %s48 = sphi 0, %s50
      %s51 = sphi 0, %s48
      %s52 = sphi 0, %s51
      %s68 = sphi 0, %s52
      %s82 = sphi 0, %s84
      %s85 = sphi 0, %s82
      %s86 = sphi 0, %s85
      %s102 = sphi 0, %s86
      %s116 = sphi 0, %s118
      %s119 = sphi 0, %s116
      %s120 = sphi 0, %s119
      %s136 = sphi 0, %s120
      %s142 = sphi 0, %s144
      %s145 = sphi 0, %s142
      %s146 = sphi 0, %s145
      %s162 = sphi 0, %s146
    $region4: #{tpu_custom_call.1} parent=1 // loop_header_branch
      %21 = sbr.rel (%p19) target = $region8
    $region5: #{tpu_custom_call.1} parent=1 // loop_body
      %s23 = ssub.s32 %s18, 1
      %s24 = ssub.s32 %s18, 2
      %s31 = sadd.s32 1, %s26
      %p32 = scmp.ge.s32.totalorder %s31, 2
      %s33 = scalar_select %p32, 0, %s31
      %s34 = sadd.s32 1, %s25
      %s35 = scalar_select %p32, %s34, %s25
      %p36 = scmp.ge.s32.totalorder %s35, 2
      %s37 = scalar_select %p36, 0, %s35
      %s38 = smul.u32 %s25, 2
      %s39 = sadd.s32 %s38, %s26
      %p40 = scmp.lt.s32.totalorder %s39, 2
      %s41 = scalar_select %p40, %s39, 2
      %s42 = smul.u32 %s37, 2
      %s43 = sadd.s32 %s42, %s33
      %p44 = scmp.lt.s32.totalorder %s43, 2
      %s45 = scalar_select %p44, %s43, 2
      %s46 = ssub.s32 %s41, %s45
      %p47 = scmp.eq.s32.totalorder %s46, 0
      %s49 = sadd.s32 %s48, 1
      %s50 = scalar_select %p47, %s48, %s49
      %p53 = pneg %p47
      %p54 = scmp.eq.s32.totalorder %s18, 3
      %p55 = por %p53, %p54
      %p56 = scmp.ne.s32.totalorder %s48, %s51
      %p57 = scmp.eq.s32.totalorder %s18, 0
      %p58 = por %p56, %p57
      %p59 = scmp.ne.s32.totalorder %s48, %s51
      %p60 = scmp.eq.s32.totalorder %s23, 3
      %p61 = por %p59, %p60
      %p62 = scmp.ne.s32.totalorder %s51, %s52
      %p63 = scmp.eq.s32.totalorder %s23, 0
      %p64 = por %p62, %p63
      %p65 = scmp.ne.s32.totalorder %s51, %s52
      %p66 = scmp.eq.s32.totalorder %s24, 3
      %p67 = por %p65, %p66
      %p69 = scmp.ne.s32.totalorder %s52, %s68
      %p70 = scmp.eq.s32.totalorder %s24, 0
      %p71 = por %p69, %p70
      %s72 = smul.u32 %s25, 2
      %s73 = sadd.s32 %s72, %s26
      %p74 = scmp.lt.s32.totalorder %s73, 2
      %s75 = scalar_select %p74, %s73, 2
      %s76 = smul.u32 %s37, 2
      %s77 = sadd.s32 %s76, %s33
      %p78 = scmp.lt.s32.totalorder %s77, 2
      %s79 = scalar_select %p78, %s77, 2
      %s80 = ssub.s32 %s75, %s79
      %p81 = scmp.eq.s32.totalorder %s80, 0
      %s83 = sadd.s32 %s82, 1
      %s84 = scalar_select %p81, %s82, %s83
      %p87 = pneg %p81
      %p88 = scmp.eq.s32.totalorder %s18, 3
      %p89 = por %p87, %p88
      %p90 = scmp.ne.s32.totalorder %s82, %s85
      %p91 = scmp.eq.s32.totalorder %s18, 0
      %p92 = por %p90, %p91
      %p93 = scmp.ne.s32.totalorder %s82, %s85
      %p94 = scmp.eq.s32.totalorder %s23, 3
      %p95 = por %p93, %p94
      %p96 = scmp.ne.s32.totalorder %s85, %s86
      %p97 = scmp.eq.s32.totalorder %s23, 0
      %p98 = por %p96, %p97
      %p99 = scmp.ne.s32.totalorder %s85, %s86
      %p100 = scmp.eq.s32.totalorder %s24, 3
      %p101 = por %p99, %p100
      %p103 = scmp.ne.s32.totalorder %s86, %s102
      %p104 = scmp.eq.s32.totalorder %s24, 0
      %p105 = por %p103, %p104
      %s106 = smul.u32 %s25, 2
      %s107 = sadd.s32 %s106, %s26
      %p108 = scmp.lt.s32.totalorder %s107, 2
      %s109 = scalar_select %p108, %s107, 2
      %s110 = smul.u32 %s37, 2
      %s111 = sadd.s32 %s110, %s33
      %p112 = scmp.lt.s32.totalorder %s111, 2
      %s113 = scalar_select %p112, %s111, 2
      %s114 = ssub.s32 %s109, %s113
      %p115 = scmp.eq.s32.totalorder %s114, 0
      %s117 = sadd.s32 %s116, 1
      %s118 = scalar_select %p115, %s116, %s117
      %p121 = pneg %p115
      %p122 = scmp.eq.s32.totalorder %s18, 3
      %p123 = por %p121, %p122
      %p124 = scmp.ne.s32.totalorder %s116, %s119
      %p125 = scmp.eq.s32.totalorder %s18, 0
      %p126 = por %p124, %p125
      %p127 = scmp.ne.s32.totalorder %s116, %s119
      %p128 = scmp.eq.s32.totalorder %s23, 3
      %p129 = por %p127, %p128
      %p130 = scmp.ne.s32.totalorder %s119, %s120
      %p131 = scmp.eq.s32.totalorder %s23, 0
      %p132 = por %p130, %p131
      %p133 = scmp.ne.s32.totalorder %s119, %s120
      %p134 = scmp.eq.s32.totalorder %s24, 3
      %p135 = por %p133, %p134
      %p137 = scmp.ne.s32.totalorder %s120, %s136
      %p138 = scmp.eq.s32.totalorder %s24, 0
      %p139 = por %p137, %p138
      %s140 = ssub.s32 %s25, %s37
      %p141 = scmp.eq.s32.totalorder %s140, 0
      %s143 = sadd.s32 %s142, 1
      %s144 = scalar_select %p141, %s142, %s143
      %p147 = pneg %p141
      %p148 = scmp.eq.s32.totalorder %s18, 3
      %p149 = por %p147, %p148
      %p150 = scmp.ne.s32.totalorder %s142, %s145
      %p151 = scmp.eq.s32.totalorder %s18, 0
      %p152 = por %p150, %p151
      %p153 = scmp.ne.s32.totalorder %s142, %s145
      %p154 = scmp.eq.s32.totalorder %s23, 3
      %p155 = por %p153, %p154
      %p156 = scmp.ne.s32.totalorder %s145, %s146
      %p157 = scmp.eq.s32.totalorder %s23, 0
      %p158 = por %p156, %p157
      %p159 = scmp.ne.s32.totalorder %s145, %s146
      %p160 = scmp.eq.s32.totalorder %s24, 3
      %p161 = por %p159, %p160
      %p163 = scmp.ne.s32.totalorder %s146, %s162
      %p164 = scmp.eq.s32.totalorder %s24, 0
      %p165 = por %p163, %p164
      %p166 = scmp.le.s32.totalorder 1, %s18
      %p167 = scmp.lt.s32.totalorder %s18, 5
      %p168 = pnand %p166, %p167
      %p169 = pneg %p168
      // Predicated region
      $region9: #{tpu_custom_call.1} parent=5 // pred_check
        _
      $region10: #{tpu_custom_call.1} parent=5 // pred_check_branch
        %171 = sbr.rel (%p168) target = $region12
      $region11: #{tpu_custom_call.1} parent=5 // pred_region
        %s172 = ssub.s32 %s18, 1
      $region12: #{tpu_custom_call.1} parent=5 // pred_fallthru
        _
      %p173 = scmp.lt.s32.totalorder %s18, 4
      // Predicated region
      $region13: #{tpu_custom_call.1} parent=5 // pred_check
        %p174 = pneg %p173
      $region14: #{tpu_custom_call.1} parent=5 // pred_check_branch
        %176 = sbr.rel (%p174) target = $region16
      $region15: #{tpu_custom_call.1} parent=5 // pred_region
        // Predicated region
        $region17: #{tpu_custom_call.1} parent=15 // pred_check
          %p177 = pneg %p58
        $region18: #{tpu_custom_call.1} parent=15 // pred_check_branch
          %179 = sbr.rel (%p177) target = $region20
        $region19: #{tpu_custom_call.1} parent=15 // pred_region
          %s180 = sand.u32 %s48, 1
          %s181 = scalar_lea.sflag [#allocation3], %s180
          %s182 = sand.u32 %s48, 1
          %s183 = smul.addr %s182, 16
          %s184 = scalar_lea.vmem [#allocation2], %s183
          %s185 = smul.u32 %s25, 2
          %s186 = sadd.s32 %s185, %s26
          %p187 = scmp.lt.s32.totalorder %s186, 2
          %s188 = scalar_select %p187, %s186, 2
          %s189 = smul.u32 2, %s188
          %s190 = ssub.s32 5, %s189
          %p191 = scmp.lt.s32.totalorder %s190, 2
          %s192 = scalar_select %p191, %s190, 2
          %s193 = smul.u32 128, %s192
          %s195 = ssub.s32 256, %s193
          %196 = vsyncadd %s181, %s195
          %p197 = scmp.ne.s32.totalorder 0, %s193
          %s198 = smul.addr %s189, 128
          %s199 = scalar_lea.hbm %s0, %s198
          %s200 = smul.u32 8, %s192
          %s201 = sshll.u32 %s184, 4
          %s202 = int_to_ptr.vmem [resolvable:$true] %s201
          %s203 = sshll.u32 %s200, 4
          %207 = dma.hbm_to_vmem [thread:$0]  (%p197), %s199, %s203, %s202, %s181, 128, 128, 8
        $region20: #{tpu_custom_call.1} parent=15 // pred_fallthru
          _
        // Predicated region
        $region21: #{tpu_custom_call.1} parent=15 // pred_check
          %p208 = pneg %p92
        $region22: #{tpu_custom_call.1} parent=15 // pred_check_branch
          %210 = sbr.rel (%p208) target = $region24
        $region23: #{tpu_custom_call.1} parent=15 // pred_region
          %s211 = sand.u32 %s82, 1
          %s212 = scalar_lea.sflag [#allocation6], %s211
          %s213 = sand.u32 %s82, 1
          %s214 = smul.addr %s213, 16
          %s215 = scalar_lea.vmem [#allocation5], %s214
          %s216 = smul.u32 %s25, 2
          %s217 = sadd.s32 %s216, %s26
          %p218 = scmp.lt.s32.totalorder %s217, 2
          %s219 = scalar_select %p218, %s217, 2
          %s220 = smul.u32 2, %s219
          %s221 = ssub.s32 5, %s220
          %p222 = scmp.lt.s32.totalorder %s221, 2
          %s223 = scalar_select %p222, %s221, 2
          %s224 = smul.u32 128, %s223
          %s226 = ssub.s32 256, %s224
          %227 = vsyncadd %s212, %s226
          %p228 = scmp.ne.s32.totalorder 0, %s224
          %s229 = smul.addr %s220, 128
          %s230 = scalar_lea.hbm %s1, %s229
          %s231 = smul.u32 8, %s223
          %s232 = sshll.u32 %s215, 4
          %s233 = int_to_ptr.vmem [resolvable:$true] %s232
          %s234 = sshll.u32 %s231, 4
          %238 = dma.hbm_to_vmem [thread:$0]  (%p228), %s230, %s234, %s233, %s212, 128, 128, 8
        $region24: #{tpu_custom_call.1} parent=15 // pred_fallthru
          _
        // Predicated region
        $region25: #{tpu_custom_call.1} parent=15 // pred_check
          %p239 = pneg %p126
        $region26: #{tpu_custom_call.1} parent=15 // pred_check_branch
          %241 = sbr.rel (%p239) target = $region28
        $region27: #{tpu_custom_call.1} parent=15 // pred_region
          %s242 = smul.u32 %s25, 2
          %s243 = sadd.s32 %s242, %s26
          %p244 = scmp.lt.s32.totalorder %s243, 2
          %s245 = scalar_select %p244, %s243, 2
          %s246 = smul.u32 2, %s245
          %s247 = ssub.s32 5, %s246
          %p248 = scmp.lt.s32.totalorder %s247, 2
          %s249 = scalar_select %p248, %s247, 2
          %s250 = smul.u32 64, %s249
          %p251 = scmp.lt.s32.totalorder %s246, 4
          %s252 = scalar_select %p251, %s246, 4
          %s253 = smul.addr %s252, 4
          %s254 = scalar_lea.vmem %s2, %s253
          %s255 = smul.u32 %s25, 2
          %s256 = sadd.s32 %s255, %s26
          %p257 = scmp.lt.s32.totalorder %s256, 2
          %s258 = scalar_select %p257, %s256, 2
          %s259 = smul.u32 2, %s258
          %s260 = ssub.s32 5, %s259
          %p261 = scmp.lt.s32.totalorder %s260, 2
          %s262 = scalar_select %p261, %s260, 2
          %s263 = smul.u32 64, %s262
        $region28: #{tpu_custom_call.1} parent=15 // pred_fallthru
          _
      $region16: #{tpu_custom_call.1} parent=5 // pred_fallthru
        _
      %p264 = scmp.le.s32.totalorder 1, %s18
      %p265 = scmp.lt.s32.totalorder %s18, 5
      %p266 = pnand %p264, %p265
      %p267 = pneg %p266
      // Predicated region
      $region29: #{tpu_custom_call.1} parent=5 // pred_check
        _
      $region30: #{tpu_custom_call.1} parent=5 // pred_check_branch
        %269 = sbr.rel (%p266) target = $region32
      $region31: #{tpu_custom_call.1} parent=5 // pred_region
        %s270 = ssub.s32 %s18, 1
        %s271 = sand.u32 %s51, 1
        %s272 = scalar_lea.sflag [#allocation3], %s271
        %s273 = sand.u32 %s51, 1
        %s274 = smul.addr %s273, 16
        %s275 = scalar_lea.vmem [#allocation2], %s274
        // Predicated region
        $region33: #{tpu_custom_call.1} parent=31 // pred_check
          %p276 = pneg %p64
        $region34: #{tpu_custom_call.1} parent=31 // pred_check_branch
          %278 = sbr.rel (%p276) target = $region36
        $region35: #{tpu_custom_call.1} parent=31 // pred_region
          %279 = dma.done %s272, 256
        $region36: #{tpu_custom_call.1} parent=31 // pred_fallthru
          _
        %s280 = sand.u32 %s85, 1
        %s281 = scalar_lea.sflag [#allocation6], %s280
        %s282 = sand.u32 %s85, 1
        %s283 = smul.addr %s282, 16
        %s284 = scalar_lea.vmem [#allocation5], %s283
        // Predicated region
        $region37: #{tpu_custom_call.1} parent=31 // pred_check
          %p285 = pneg %p98
        $region38: #{tpu_custom_call.1} parent=31 // pred_check_branch
          %287 = sbr.rel (%p285) target = $region40
        $region39: #{tpu_custom_call.1} parent=31 // pred_region
          %288 = dma.done %s281, 256
        $region40: #{tpu_custom_call.1} parent=31 // pred_fallthru
          _
        %s289 = sand.u32 %s51, 1
        %s290 = scalar_lea.sflag [#allocation3], %s289
        %s291 = sand.u32 %s51, 1
        %s292 = smul.addr %s291, 16
        %s293 = scalar_lea.vmem [#allocation2], %s292
        %p294 = pneg %p64
        %p295 = pneg %p61
        %s296 = sand.u32 %s85, 1
        %s297 = scalar_lea.sflag [#allocation6], %s296
        %s298 = sand.u32 %s85, 1
        %s299 = smul.addr %s298, 16
        %s300 = scalar_lea.vmem [#allocation5], %s299
        %p301 = pneg %p98
        %p302 = pneg %p95
        %s303 = smul.u32 %s27, 2
        %s304 = sadd.s32 %s303, %s28
        %p305 = scmp.lt.s32.totalorder %s304, 2
        %s306 = scalar_select %p305, %s304, 2
        %s307 = smul.u32 2, %s306
        %s308 = ssub.s32 5, %s307
        %p309 = scmp.lt.s32.totalorder %s308, 2
        %s310 = scalar_select %p309, %s308, 2
        %s311 = smul.u32 64, %s310
        %p312 = scmp.lt.s32.totalorder %s307, 4
        %s313 = scalar_select %p312, %s307, 4
        %s314 = smul.addr %s313, 4
        %s315 = scalar_lea.vmem %s2, %s314
        %p316 = pneg %p132
        %p317 = pneg %p129
        %p318 = pneg %p158
        %p319 = pneg %p155
        %s320 = sand.u32 %s145, 1
        %s321 = scalar_lea.sflag [#allocation4], %s320
        %s322 = sand.u32 %s145, 1
        %s323 = smul.addr %s322, 8
        %s324 = scalar_lea.vmem [#allocation7], %s323
        %s325 = smul.u32 %s27, 2
        %s326 = sadd.s32 %s325, %s28
        %p327 = scmp.lt.s32.totalorder %s326, 2
        %s328 = scalar_select %p327, %s326, 2
        %s329 = smul.u32 2, %s328
        %s330 = ssub.s32 5, %s329
        %p331 = scmp.lt.s32.totalorder %s330, 2
        %s332 = scalar_select %p331, %s330, 2
        %s333 = smul.u32 128, %s332
        %s334 = smul.u32 %s27, 2
        %s335 = sadd.s32 %s334, %s28
        %p336 = scmp.lt.s32.totalorder %s335, 2
        %s337 = scalar_select %p336, %s335, 2
        %s338 = smul.u32 2, %s337
        %s339 = ssub.s32 5, %s338
        %p340 = scmp.lt.s32.totalorder %s339, 2
        %s341 = scalar_select %p340, %s339, 2
        %s342 = smul.u32 128, %s341
        %s343 = smul.u32 %s27, 2
        %s344 = sadd.s32 %s343, %s28
        %p345 = scmp.lt.s32.totalorder %s344, 2
        %s346 = scalar_select %p345, %s344, 2
        %s347 = smul.u32 2, %s346
        %s348 = ssub.s32 5, %s347
        %p349 = scmp.lt.s32.totalorder %s348, 2
        %s350 = scalar_select %p349, %s348, 2
        %s351 = smul.u32 64, %s350
        %p352 = scmp.lt.s32.totalorder %s347, 4
        %s353 = scalar_select %p352, %s347, 4
        %s354 = smul.addr %s353, 4
        %s355 = scalar_lea.vmem %s2, %s354
        %s356 = smul.u32 %s27, 2
        %s357 = sadd.s32 %s356, %s28
        %p358 = scmp.lt.s32.totalorder %s357, 2
        %s359 = scalar_select %p358, %s357, 2
        %s360 = smul.u32 2, %s359
        %s361 = ssub.s32 5, %s360
        %p362 = scmp.lt.s32.totalorder %s361, 2
        %s363 = scalar_select %p362, %s361, 2
        %s364 = smul.u32 64, %s363
        %s365 = smul.u32 %s27, 2
        %s366 = sadd.s32 %s365, %s28
        %p367 = scmp.eq.s32.totalorder %s28, 0
        // Predicated region
        $region41: #{tpu_custom_call.1} parent=31 // pred_check
          %p368 = pneg %p367
        $region42: #{tpu_custom_call.1} parent=31 // pred_check_branch
          %370 = sbr.rel (%p368) target = $region44
        $region43: #{tpu_custom_call.1} parent=31 // pred_region
          %371 = vst [vmem:[%s324] sm:$0xff] 0.0
        $region44: #{tpu_custom_call.1} parent=31 // pred_fallthru
          _
        %p372 = scmp.lt.s32.totalorder %s366, 2
        // Predicated region
        $region45: #{tpu_custom_call.1} parent=31 // pred_check
          %p373 = pneg %p372
        $region46: #{tpu_custom_call.1} parent=31 // pred_check_branch
          %375 = sbr.rel (%p373) target = $region48
        $region47: #{tpu_custom_call.1} parent=31 // pred_region
          %v376 = vld [vmem:[%s324] sm:$0xff]
          %v377 = vld [vmem:[%s275] sm:$0xff]
          %v378 = vld [vmem:[%s275 + $0x8] sm:$0xff]
          %v379 = vld [vmem:[%s284] sm:$0xff]
          %v380 = vld [vmem:[%s284 + $0x8] sm:$0xff]
          %v381 = vld [vmem:[%s355] sm:$0xf]
          %v382 = vld [vmem:[%s355 + $0x4] sm:$0xf]
          %v383 = vunpack.c.l.bf16 %v381
          %v384 = vunpack.c.l.bf16 %v382
          %v385 = vsub.f32 %v377, %v379
          %v386 = vsub.f32 %v378, %v380
          %v387 = vadd.f32 %v385, 1e-06
          %v388 = vadd.f32 %v386, 1e-06
          %v389 = vmul.f32 %v387, %v387
          %v390 = vmul.f32 %v388, %v388
          %391 = vmatprep.subr.mxu0 0.0
          %392 = vmatpush1.msra.mxu0 1.0
          %393 = vmatprep.subr.mxu0 0.0
          %394 = vmatpush1.msra.mxu0 1.0
          %395 = vmatprep.subr.mxu0 0.0
          %396 = vmatpush1.msra.mxu0 1.0
          %397 = vmatprep.subr.mxu0 0.0
          %398 = vmatpush1.msra.mxu0 1.0
          %399 = vmatprep.subr.mxu0 0.0
          %400 = vmatpush1.msra.mxu0 1.0
          %401 = vmatprep.subr.mxu0 0.0
          %402 = vmatpush1.msra.mxu0 1.0
          %403 = vmatprep.subr.mxu0 0.0
          %404 = vmatpush1.msra.mxu0 1.0
          %405 = vmatprep.subr.mxu0 0.0
          %406 = vmatpush1.msra.mxu0 1.0
          %407 = vmatprep.subr.mxu0 0.0
          %408 = vmatpush1.msra.mxu0 1.0
          %409 = vmatprep.subr.mxu0 0.0
          %410 = vmatpush1.msra.mxu0 1.0
          %411 = vmatprep.subr.mxu0 0.0
          %412 = vmatpush1.msra.mxu0 1.0
          %413 = vmatprep.subr.mxu0 0.0
          %414 = vmatpush1.msra.mxu0 1.0
          %415 = vmatprep.subr.mxu0 0.0
          %416 = vmatpush1.msra.mxu0 1.0
          %417 = vmatprep.subr.mxu0 0.0
          %418 = vmatpush1.msra.mxu0 1.0
          %419 = vmatprep.subr.mxu0 0.0
          %420 = vmatpush1.msra.mxu0 1.0
          %421 = vmatprep.subr.mxu0 0.0
          %422 = vmatpush1.msra.mxu0 1.0
          %423 = vmatprep.subr.mxu0 0.0
          %424 = vmatpush2.msra.mxu0 0.0
          %425 = vmatprep.subr.mxu0 0.0
          %426 = vmatpush2.msra.mxu0 0.0
          %427 = vmatprep.subr.mxu0 0.0
          %428 = vmatpush2.msra.mxu0 0.0
          %429 = vmatprep.subr.mxu0 0.0
          %430 = vmatpush2.msra.mxu0 0.0
          %431 = vmatprep.subr.mxu0 0.0
          %432 = vmatpush2.msra.mxu0 0.0
          %433 = vmatprep.subr.mxu0 0.0
          %434 = vmatpush2.msra.mxu0 0.0
          %435 = vmatprep.subr.mxu0 0.0
          %436 = vmatpush2.msra.mxu0 0.0
          %437 = vmatprep.subr.mxu0 0.0
          %438 = vmatpush2.msra.mxu0 0.0
          %439 = vmatprep.subr.mxu0 0.0
          %440 = vmatpush2.msra.mxu0 0.0
          %441 = vmatprep.subr.mxu0 0.0
          %442 = vmatpush2.msra.mxu0 0.0
          %443 = vmatprep.subr.mxu0 0.0
          %444 = vmatpush2.msra.mxu0 0.0
          %445 = vmatprep.subr.mxu0 0.0
          %446 = vmatpush2.msra.mxu0 0.0
          %447 = vmatprep.subr.mxu0 0.0
          %448 = vmatpush2.msra.mxu0 0.0
          %449 = vmatprep.subr.mxu0 0.0
          %450 = vmatpush2.msra.mxu0 0.0
          %451 = vmatprep.subr.mxu0 0.0
          %452 = vmatpush2.msra.mxu0 0.0
          %453 = vmatprep.subr.mxu0 0.0
          %454 = vmatpush2.msra.mxu0 0.0
          %455 = vmatprep.mubr.f32.mxu0 0.0
          %v456 = vand.u32 %v389, 4294901760
          %v457 = vsub.f32 %v389, %v456
          %v458 = vand.u32 %v457, 4294901760
          %v459 = vsub.f32 %v457, %v458
          %v460 = vand.u32 %v459, 4294901760
          %461 = vmatmul.mubr.f32.gmra.mxu0 %v460
          %v462 = vpop.f32.mrf.mxu0
          %v463 = vadd.f32 0.0, %v462
          %v464 = vpop.f32.mrf.mxu0
          %465 = vmatprep.mubr.f32.mxu0 0.0
          %v466 = vand.u32 %v390, 4294901760
          %v467 = vsub.f32 %v390, %v466
          %v468 = vand.u32 %v467, 4294901760
          %v469 = vsub.f32 %v467, %v468
          %v470 = vand.u32 %v469, 4294901760
          %471 = vmatmul.mubr.f32.gmra.mxu0 %v470
          %v472 = vpop.f32.mrf.mxu0
          %v473 = vadd.f32 0.0, %v472
          %v474 = vpop.f32.mrf.mxu0
          %475 = vdwg.mxu0
          %476 = vmatprep.subr.mxu0 0.0
          %477 = vmatpush1.msra.mxu0 0.0
          %478 = vmatprep.subr.mxu0 0.0
          %479 = vmatpush1.msra.mxu0 0.0
          %480 = vmatprep.subr.mxu0 0.0
          %481 = vmatpush1.msra.mxu0 0.0
          %482 = vmatprep.subr.mxu0 0.0
          %483 = vmatpush1.msra.mxu0 0.0
          %484 = vmatprep.subr.mxu0 0.0
          %485 = vmatpush1.msra.mxu0 0.0
          %486 = vmatprep.subr.mxu0 0.0
          %487 = vmatpush1.msra.mxu0 0.0
          %488 = vmatprep.subr.mxu0 0.0
          %489 = vmatpush1.msra.mxu0 0.0
          %490 = vmatprep.subr.mxu0 0.0
          %491 = vmatpush1.msra.mxu0 0.0
          %492 = vmatprep.subr.mxu0 0.0
          %493 = vmatpush1.msra.mxu0 0.0
          %494 = vmatprep.subr.mxu0 0.0
          %495 = vmatpush1.msra.mxu0 0.0
          %496 = vmatprep.subr.mxu0 0.0
          %497 = vmatpush1.msra.mxu0 0.0
          %498 = vmatprep.subr.mxu0 0.0
          %499 = vmatpush1.msra.mxu0 0.0
          %500 = vmatprep.subr.mxu0 0.0
          %501 = vmatpush1.msra.mxu0 0.0
          %502 = vmatprep.subr.mxu0 0.0
          %503 = vmatpush1.msra.mxu0 0.0
          %504 = vmatprep.subr.mxu0 0.0
          %505 = vmatpush1.msra.mxu0 0.0
          %506 = vmatprep.subr.mxu0 0.0
          %507 = vmatpush1.msra.mxu0 0.0
          %508 = vmatprep.subr.mxu0 0.0
          %509 = vmatpush2.msra.mxu0 0.0
          %510 = vmatprep.subr.mxu0 0.0
          %511 = vmatpush2.msra.mxu0 0.0
          %512 = vmatprep.subr.mxu0 0.0
          %513 = vmatpush2.msra.mxu0 0.0
          %514 = vmatprep.subr.mxu0 0.0
          %515 = vmatpush2.msra.mxu0 0.0
          %516 = vmatprep.subr.mxu0 0.0
          %517 = vmatpush2.msra.mxu0 0.0
          %518 = vmatprep.subr.mxu0 0.0
          %519 = vmatpush2.msra.mxu0 0.0
          %520 = vmatprep.subr.mxu0 0.0
          %521 = vmatpush2.msra.mxu0 0.0
          %522 = vmatprep.subr.mxu0 0.0
          %523 = vmatpush2.msra.mxu0 0.0
          %524 = vmatprep.subr.mxu0 0.0
          %525 = vmatpush2.msra.mxu0 0.0
          %526 = vmatprep.subr.mxu0 0.0
          %527 = vmatpush2.msra.mxu0 0.0
          %528 = vmatprep.subr.mxu0 0.0
          %529 = vmatpush2.msra.mxu0 0.0
          %530 = vmatprep.subr.mxu0 0.0
          %531 = vmatpush2.msra.mxu0 0.0
          %532 = vmatprep.subr.mxu0 0.0
          %533 = vmatpush2.msra.mxu0 0.0
          %534 = vmatprep.subr.mxu0 0.0
          %535 = vmatpush2.msra.mxu0 0.0
          %536 = vmatprep.subr.mxu0 0.0
          %537 = vmatpush2.msra.mxu0 0.0
          %538 = vmatprep.subr.mxu0 0.0
          %539 = vmatpush2.msra.mxu0 0.0
          %540 = vmatprep.mubr.f32.mxu0 0.0
          %v541 = vand.u32 %v389, 4294901760
          %542 = vmatmul.mubr.f32.gmra.mxu0 %v541
          %v543 = vpop.f32.mrf.mxu0
          %v544 = vadd.f32 %v463, %v543
          %v545 = vpop.f32.mrf.mxu0
          %546 = vmatprep.mubr.f32.mxu0 0.0
          %v547 = vand.u32 %v390, 4294901760
          %548 = vmatmul.mubr.f32.gmra.mxu0 %v547
          %v549 = vpop.f32.mrf.mxu0
          %v550 = vadd.f32 %v473, %v549
          %v551 = vpop.f32.mrf.mxu0
          %552 = vdwg.mxu0
          %553 = vmatprep.subr.mxu0 0.0
          %554 = vmatpush1.msra.mxu0 0.0
          %555 = vmatprep.subr.mxu0 0.0
          %556 = vmatpush1.msra.mxu0 0.0
          %557 = vmatprep.subr.mxu0 0.0
          %558 = vmatpush1.msra.mxu0 0.0
          %559 = vmatprep.subr.mxu0 0.0
          %560 = vmatpush1.msra.mxu0 0.0
          %561 = vmatprep.subr.mxu0 0.0
          %562 = vmatpush1.msra.mxu0 0.0
          %563 = vmatprep.subr.mxu0 0.0
          %564 = vmatpush1.msra.mxu0 0.0
          %565 = vmatprep.subr.mxu0 0.0
          %566 = vmatpush1.msra.mxu0 0.0
          %567 = vmatprep.subr.mxu0 0.0
          %568 = vmatpush1.msra.mxu0 0.0
          %569 = vmatprep.subr.mxu0 0.0
          %570 = vmatpush1.msra.mxu0 0.0
          %571 = vmatprep.subr.mxu0 0.0
          %572 = vmatpush1.msra.mxu0 0.0
          %573 = vmatprep.subr.mxu0 0.0
          %574 = vmatpush1.msra.mxu0 0.0
          %575 = vmatprep.subr.mxu0 0.0
          %576 = vmatpush1.msra.mxu0 0.0
          %577 = vmatprep.subr.mxu0 0.0
          %578 = vmatpush1.msra.mxu0 0.0
          %579 = vmatprep.subr.mxu0 0.0
          %580 = vmatpush1.msra.mxu0 0.0
          %581 = vmatprep.subr.mxu0 0.0
          %582 = vmatpush1.msra.mxu0 0.0
          %583 = vmatprep.subr.mxu0 0.0
          %584 = vmatpush1.msra.mxu0 0.0
          %585 = vmatprep.subr.mxu0 0.0
          %586 = vmatpush2.msra.mxu0 0.0
          %587 = vmatprep.subr.mxu0 0.0
          %588 = vmatpush2.msra.mxu0 0.0
          %589 = vmatprep.subr.mxu0 0.0
          %590 = vmatpush2.msra.mxu0 0.0
          %591 = vmatprep.subr.mxu0 0.0
          %592 = vmatpush2.msra.mxu0 0.0
          %593 = vmatprep.subr.mxu0 0.0
          %594 = vmatpush2.msra.mxu0 0.0
          %595 = vmatprep.subr.mxu0 0.0
          %596 = vmatpush2.msra.mxu0 0.0
          %597 = vmatprep.subr.mxu0 0.0
          %598 = vmatpush2.msra.mxu0 0.0
          %599 = vmatprep.subr.mxu0 0.0
          %600 = vmatpush2.msra.mxu0 0.0
          %601 = vmatprep.subr.mxu0 0.0
          %602 = vmatpush2.msra.mxu0 0.0
          %603 = vmatprep.subr.mxu0 0.0
          %604 = vmatpush2.msra.mxu0 0.0
          %605 = vmatprep.subr.mxu0 0.0
          %606 = vmatpush2.msra.mxu0 0.0
          %607 = vmatprep.subr.mxu0 0.0
          %608 = vmatpush2.msra.mxu0 0.0
          %609 = vmatprep.subr.mxu0 0.0
          %610 = vmatpush2.msra.mxu0 0.0
          %611 = vmatprep.subr.mxu0 0.0
          %612 = vmatpush2.msra.mxu0 0.0
          %613 = vmatprep.subr.mxu0 0.0
          %614 = vmatpush2.msra.mxu0 0.0
          %615 = vmatprep.subr.mxu0 0.0
          %616 = vmatpush2.msra.mxu0 0.0
          %617 = vmatprep.mubr.f32.mxu0 0.0
          %v618 = vand.u32 %v389, 4294901760
          %v619 = vsub.f32 %v389, %v618
          %620 = vmatmul.mubr.f32.gmra.mxu0 %v619
          %v621 = vpop.f32.mrf.mxu0
          %v622 = vadd.f32 %v544, %v621
          %v623 = vpop.f32.mrf.mxu0
          %624 = vmatprep.mubr.f32.mxu0 0.0
          %v625 = vand.u32 %v390, 4294901760
          %v626 = vsub.f32 %v390, %v625
          %627 = vmatmul.mubr.f32.gmra.mxu0 %v626
          %v628 = vpop.f32.mrf.mxu0
          %v629 = vadd.f32 %v550, %v628
          %v630 = vpop.f32.mrf.mxu0
          %631 = vdwg.mxu0
          %632 = vmatprep.subr.mxu0 0.0
          %633 = vmatpush1.msra.mxu0 1.0
          %634 = vmatprep.subr.mxu0 0.0
          %635 = vmatpush1.msra.mxu0 1.0
          %636 = vmatprep.subr.mxu0 0.0
          %637 = vmatpush1.msra.mxu0 1.0
          %638 = vmatprep.subr.mxu0 0.0
          %639 = vmatpush1.msra.mxu0 1.0
          %640 = vmatprep.subr.mxu0 0.0
          %641 = vmatpush1.msra.mxu0 1.0
          %642 = vmatprep.subr.mxu0 0.0
          %643 = vmatpush1.msra.mxu0 1.0
          %644 = vmatprep.subr.mxu0 0.0
          %645 = vmatpush1.msra.mxu0 1.0
          %646 = vmatprep.subr.mxu0 0.0
          %647 = vmatpush1.msra.mxu0 1.0
          %648 = vmatprep.subr.mxu0 0.0
          %649 = vmatpush1.msra.mxu0 1.0
          %650 = vmatprep.subr.mxu0 0.0
          %651 = vmatpush1.msra.mxu0 1.0
          %652 = vmatprep.subr.mxu0 0.0
          %653 = vmatpush1.msra.mxu0 1.0
          %654 = vmatprep.subr.mxu0 0.0
          %655 = vmatpush1.msra.mxu0 1.0
          %656 = vmatprep.subr.mxu0 0.0
          %657 = vmatpush1.msra.mxu0 1.0
          %658 = vmatprep.subr.mxu0 0.0
          %659 = vmatpush1.msra.mxu0 1.0
          %660 = vmatprep.subr.mxu0 0.0
          %661 = vmatpush1.msra.mxu0 1.0
          %662 = vmatprep.subr.mxu0 0.0
          %663 = vmatpush1.msra.mxu0 1.0
          %664 = vmatprep.subr.mxu0 0.0
          %665 = vmatpush2.msra.mxu0 0.0
          %666 = vmatprep.subr.mxu0 0.0
          %667 = vmatpush2.msra.mxu0 0.0
          %668 = vmatprep.subr.mxu0 0.0
          %669 = vmatpush2.msra.mxu0 0.0
          %670 = vmatprep.subr.mxu0 0.0
          %671 = vmatpush2.msra.mxu0 0.0
          %672 = vmatprep.subr.mxu0 0.0
          %673 = vmatpush2.msra.mxu0 0.0
          %674 = vmatprep.subr.mxu0 0.0
          %675 = vmatpush2.msra.mxu0 0.0
          %676 = vmatprep.subr.mxu0 0.0
          %677 = vmatpush2.msra.mxu0 0.0
          %678 = vmatprep.subr.mxu0 0.0
          %679 = vmatpush2.msra.mxu0 0.0
          %680 = vmatprep.subr.mxu0 0.0
          %681 = vmatpush2.msra.mxu0 0.0
          %682 = vmatprep.subr.mxu0 0.0
          %683 = vmatpush2.msra.mxu0 0.0
          %684 = vmatprep.subr.mxu0 0.0
          %685 = vmatpush2.msra.mxu0 0.0
          %686 = vmatprep.subr.mxu0 0.0
          %687 = vmatpush2.msra.mxu0 0.0
          %688 = vmatprep.subr.mxu0 0.0
          %689 = vmatpush2.msra.mxu0 0.0
          %690 = vmatprep.subr.mxu0 0.0
          %691 = vmatpush2.msra.mxu0 0.0
          %692 = vmatprep.subr.mxu0 0.0
          %693 = vmatpush2.msra.mxu0 0.0
          %694 = vmatprep.subr.mxu0 0.0
          %695 = vmatpush2.msra.mxu0 0.0
          %696 = vmatprep.mubr.f32.mxu0 0.0
          %v697 = vand.u32 %v389, 4294901760
          %v698 = vsub.f32 %v389, %v697
          %v699 = vand.u32 %v698, 4294901760
          %700 = vmatmul.mubr.f32.gmra.mxu0 %v699
          %v701 = vpop.f32.mrf.mxu0
          %v702 = vadd.f32 %v622, %v701
          %v703 = vpop.f32.mrf.mxu0
          %704 = vmatprep.mubr.f32.mxu0 0.0
          %v705 = vand.u32 %v390, 4294901760
          %v706 = vsub.f32 %v390, %v705
          %v707 = vand.u32 %v706, 4294901760
          %708 = vmatmul.mubr.f32.gmra.mxu0 %v707
          %v709 = vpop.f32.mrf.mxu0
          %v710 = vadd.f32 %v629, %v709
          %v711 = vpop.f32.mrf.mxu0
          %712 = vdwg.mxu0
          %713 = vmatprep.subr.mxu0 0.0
          %714 = vmatpush1.msra.mxu0 0.0
          %715 = vmatprep.subr.mxu0 0.0
          %716 = vmatpush1.msra.mxu0 0.0
          %717 = vmatprep.subr.mxu0 0.0
          %718 = vmatpush1.msra.mxu0 0.0
          %719 = vmatprep.subr.mxu0 0.0
          %720 = vmatpush1.msra.mxu0 0.0
          %721 = vmatprep.subr.mxu0 0.0
          %722 = vmatpush1.msra.mxu0 0.0
          %723 = vmatprep.subr.mxu0 0.0
          %724 = vmatpush1.msra.mxu0 0.0
          %725 = vmatprep.subr.mxu0 0.0
          %726 = vmatpush1.msra.mxu0 0.0
          %727 = vmatprep.subr.mxu0 0.0
          %728 = vmatpush1.msra.mxu0 0.0
          %729 = vmatprep.subr.mxu0 0.0
          %730 = vmatpush1.msra.mxu0 0.0
          %731 = vmatprep.subr.mxu0 0.0
          %732 = vmatpush1.msra.mxu0 0.0
          %733 = vmatprep.subr.mxu0 0.0
          %734 = vmatpush1.msra.mxu0 0.0
          %735 = vmatprep.subr.mxu0 0.0
          %736 = vmatpush1.msra.mxu0 0.0
          %737 = vmatprep.subr.mxu0 0.0
          %738 = vmatpush1.msra.mxu0 0.0
          %739 = vmatprep.subr.mxu0 0.0
          %740 = vmatpush1.msra.mxu0 0.0
          %741 = vmatprep.subr.mxu0 0.0
          %742 = vmatpush1.msra.mxu0 0.0
          %743 = vmatprep.subr.mxu0 0.0
          %744 = vmatpush1.msra.mxu0 0.0
          %745 = vmatprep.subr.mxu0 0.0
          %746 = vmatpush2.msra.mxu0 0.0
          %747 = vmatprep.subr.mxu0 0.0
          %748 = vmatpush2.msra.mxu0 0.0
          %749 = vmatprep.subr.mxu0 0.0
          %750 = vmatpush2.msra.mxu0 0.0
          %751 = vmatprep.subr.mxu0 0.0
          %752 = vmatpush2.msra.mxu0 0.0
          %753 = vmatprep.subr.mxu0 0.0
          %754 = vmatpush2.msra.mxu0 0.0
          %755 = vmatprep.subr.mxu0 0.0
          %756 = vmatpush2.msra.mxu0 0.0
          %757 = vmatprep.subr.mxu0 0.0
          %758 = vmatpush2.msra.mxu0 0.0
          %759 = vmatprep.subr.mxu0 0.0
          %760 = vmatpush2.msra.mxu0 0.0
          %761 = vmatprep.subr.mxu0 0.0
          %762 = vmatpush2.msra.mxu0 0.0
          %763 = vmatprep.subr.mxu0 0.0
          %764 = vmatpush2.msra.mxu0 0.0
          %765 = vmatprep.subr.mxu0 0.0
          %766 = vmatpush2.msra.mxu0 0.0
          %767 = vmatprep.subr.mxu0 0.0
          %768 = vmatpush2.msra.mxu0 0.0
          %769 = vmatprep.subr.mxu0 0.0
          %770 = vmatpush2.msra.mxu0 0.0
          %771 = vmatprep.subr.mxu0 0.0
          %772 = vmatpush2.msra.mxu0 0.0
          %773 = vmatprep.subr.mxu0 0.0
          %774 = vmatpush2.msra.mxu0 0.0
          %775 = vmatprep.subr.mxu0 0.0
          %776 = vmatpush2.msra.mxu0 0.0
          %777 = vmatprep.mubr.f32.mxu0 0.0
          %v778 = vand.u32 %v389, 4294901760
          %779 = vmatmul.mubr.f32.gmra.mxu0 %v778
          %v780 = vpop.f32.mrf.mxu0
          %v781 = vadd.f32 %v702, %v780
          %v782 = vpop.f32.mrf.mxu0
          %783 = vmatprep.mubr.f32.mxu0 0.0
          %v784 = vand.u32 %v390, 4294901760
          %785 = vmatmul.mubr.f32.gmra.mxu0 %v784
          %v786 = vpop.f32.mrf.mxu0
          %v787 = vadd.f32 %v710, %v786
          %v788 = vpop.f32.mrf.mxu0
          %789 = vdwg.mxu0
          %790 = vmatprep.subr.mxu0 0.0
          %791 = vmatpush1.msra.mxu0 1.0
          %792 = vmatprep.subr.mxu0 0.0
          %793 = vmatpush1.msra.mxu0 1.0
          %794 = vmatprep.subr.mxu0 0.0
          %795 = vmatpush1.msra.mxu0 1.0
          %796 = vmatprep.subr.mxu0 0.0
          %797 = vmatpush1.msra.mxu0 1.0
          %798 = vmatprep.subr.mxu0 0.0
          %799 = vmatpush1.msra.mxu0 1.0
          %800 = vmatprep.subr.mxu0 0.0
          %801 = vmatpush1.msra.mxu0 1.0
          %802 = vmatprep.subr.mxu0 0.0
          %803 = vmatpush1.msra.mxu0 1.0
          %804 = vmatprep.subr.mxu0 0.0
          %805 = vmatpush1.msra.mxu0 1.0
          %806 = vmatprep.subr.mxu0 0.0
          %807 = vmatpush1.msra.mxu0 1.0
          %808 = vmatprep.subr.mxu0 0.0
          %809 = vmatpush1.msra.mxu0 1.0
          %810 = vmatprep.subr.mxu0 0.0
          %811 = vmatpush1.msra.mxu0 1.0
          %812 = vmatprep.subr.mxu0 0.0
          %813 = vmatpush1.msra.mxu0 1.0
          %814 = vmatprep.subr.mxu0 0.0
          %815 = vmatpush1.msra.mxu0 1.0
          %816 = vmatprep.subr.mxu0 0.0
          %817 = vmatpush1.msra.mxu0 1.0
          %818 = vmatprep.subr.mxu0 0.0
          %819 = vmatpush1.msra.mxu0 1.0
          %820 = vmatprep.subr.mxu0 0.0
          %821 = vmatpush1.msra.mxu0 1.0
          %822 = vmatprep.subr.mxu0 0.0
          %823 = vmatpush2.msra.mxu0 0.0
          %824 = vmatprep.subr.mxu0 0.0
          %825 = vmatpush2.msra.mxu0 0.0
          %826 = vmatprep.subr.mxu0 0.0
          %827 = vmatpush2.msra.mxu0 0.0
          %828 = vmatprep.subr.mxu0 0.0
          %829 = vmatpush2.msra.mxu0 0.0
          %830 = vmatprep.subr.mxu0 0.0
          %831 = vmatpush2.msra.mxu0 0.0
          %832 = vmatprep.subr.mxu0 0.0
          %833 = vmatpush2.msra.mxu0 0.0
          %834 = vmatprep.subr.mxu0 0.0
          %835 = vmatpush2.msra.mxu0 0.0
          %836 = vmatprep.subr.mxu0 0.0
          %837 = vmatpush2.msra.mxu0 0.0
          %838 = vmatprep.subr.mxu0 0.0
          %839 = vmatpush2.msra.mxu0 0.0
          %840 = vmatprep.subr.mxu0 0.0
          %841 = vmatpush2.msra.mxu0 0.0
          %842 = vmatprep.subr.mxu0 0.0
          %843 = vmatpush2.msra.mxu0 0.0
          %844 = vmatprep.subr.mxu0 0.0
          %845 = vmatpush2.msra.mxu0 0.0
          %846 = vmatprep.subr.mxu0 0.0
          %847 = vmatpush2.msra.mxu0 0.0
          %848 = vmatprep.subr.mxu0 0.0
          %849 = vmatpush2.msra.mxu0 0.0
          %850 = vmatprep.subr.mxu0 0.0
          %851 = vmatpush2.msra.mxu0 0.0
          %852 = vmatprep.subr.mxu0 0.0
          %853 = vmatpush2.msra.mxu0 0.0
          %854 = vmatprep.mubr.f32.mxu0 0.0
          %v855 = vand.u32 %v389, 4294901760
          %856 = vmatmul.mubr.f32.gmra.mxu0 %v855
          %v857 = vpop.f32.mrf.mxu0
          %v858 = vadd.f32 %v781, %v857
          %v859 = vpop.f32.mrf.mxu0
          %860 = vmatprep.mubr.f32.mxu0 0.0
          %v861 = vand.u32 %v390, 4294901760
          %862 = vmatmul.mubr.f32.gmra.mxu0 %v861
          %v863 = vpop.f32.mrf.mxu0
          %v864 = vadd.f32 %v787, %v863
          %v865 = vpop.f32.mrf.mxu0
          %866 = vdwg.mxu0
          %v867 = vrsqrt.pop %v858
          %v868 = vmul.f32 %v858, %v867
          %vm869 = vcmp.eq.f32.partialorder %v858, inf
          %v870 = vsel %vm869, %v858, %v868
          %vm871 = vcmp.eq.f32.partialorder %v858, 0.0
          %v872 = vand.u32 %v858, 2147483648
          %v873 = vsel %vm871, %v872, %v870
          %v874 = vrsqrt.pop %v864
          %v875 = vmul.f32 %v864, %v874
          %vm876 = vcmp.eq.f32.partialorder %v864, inf
          %v877 = vsel %vm876, %v864, %v875
          %vm878 = vcmp.eq.f32.partialorder %v864, 0.0
          %v879 = vand.u32 %v864, 2147483648
          %v880 = vsel %vm878, %v879, %v877
          %v881 = vsub.f32 2.0, %v873
          %v882 = vsub.f32 2.0, %v880
          %v883 = vmax.f32 %v881, 0.0
          %v884 = vmax.f32 %v882, 0.0
          %v885 = vmul.f32 %v883, %v883
          %v886 = vmul.f32 %v884, %v884
          %v887 = vsub.f32 %v885, %v858
          %v888 = vsub.f32 %v886, %v864
          %890 = vset.pattern.permute.xlu0 0
          %891 = vperm.xlu0 %890, %v383
          %v892 = vpop.permute.xlu0 %891
          %895 = vset.pattern.permute.xlu0 0
          %896 = vperm.xlu0 %895, %v384
          %v897 = vpop.permute.xlu0 %896
          %v899 = vmul.f32 %v892, %v887
          %v900 = vmul.f32 %v897, %v888
          %v901 = vadd.f32 %v858, %v899
          %v902 = vadd.f32 %v864, %v900
          %v903 = vadd.f32 %v901, %v902
          %904 = vadd.xlane.f32.xlu0 %v903
          %v905 = vpop.xlane.xlu0 %904
          %v906 = vrot.slane %v905, 4
          %v907 = vadd.f32 %v905, %v906
          %v908 = vrot.slane %v907, 2
          %v909 = vadd.f32 %v907, %v908
          %v910 = vrot.slane %v909, 1
          %v911 = vadd.f32 %v909, %v910
          %s912 = vtos %v911
          %s913 = sadd.f32 %s912, 0.0
          %s914 = smul.f32 %s913, 0.0078125
          %v915 = vstv %s914
          %v916 = vadd.f32 %v376, %v915
          %917 = vst [vmem:[%s324] sm:$0xff] %v916
        $region48: #{tpu_custom_call.1} parent=31 // pred_fallthru
          _
        %p918 = scmp.ge.s32.totalorder %s366, 2
        // Predicated region
        $region49: #{tpu_custom_call.1} parent=31 // pred_check
          %p919 = pneg %p918
        $region50: #{tpu_custom_call.1} parent=31 // pred_check_branch
          %921 = sbr.rel (%p919) target = $region52
        $region51: #{tpu_custom_call.1} parent=31 // pred_region
          %v922 = vld [vmem:[%s324] sm:$0xff]
          %v923 = vld [vmem:[%s275] sm:$0xff]
          %v924 = vld [vmem:[%s275 + $0x8] sm:$0xff]
          %v925 = vld [vmem:[%s284] sm:$0xff]
          %v926 = vld [vmem:[%s284 + $0x8] sm:$0xff]
          %v927 = vld [vmem:[%s355] sm:$0xf]
          %v928 = vld [vmem:[%s355 + $0x4] sm:$0xf]
          %v929 = vunpack.c.l.bf16 %v927
          %v930 = vunpack.c.l.bf16 %v928
          %v931 = vsub.f32 %v923, %v925
          %v932 = vsub.f32 %v924, %v926
          %v933 = vadd.f32 %v931, 1e-06
          %v934 = vadd.f32 %v932, 1e-06
          %v935 = vmul.f32 %v933, %v933
          %v936 = vmul.f32 %v934, %v934
          %937 = vmatprep.subr.mxu0 0.0
          %938 = vmatpush1.msra.mxu0 1.0
          %939 = vmatprep.subr.mxu0 0.0
          %940 = vmatpush1.msra.mxu0 1.0
          %941 = vmatprep.subr.mxu0 0.0
          %942 = vmatpush1.msra.mxu0 1.0
          %943 = vmatprep.subr.mxu0 0.0
          %944 = vmatpush1.msra.mxu0 1.0
          %945 = vmatprep.subr.mxu0 0.0
          %946 = vmatpush1.msra.mxu0 1.0
          %947 = vmatprep.subr.mxu0 0.0
          %948 = vmatpush1.msra.mxu0 1.0
          %949 = vmatprep.subr.mxu0 0.0
          %950 = vmatpush1.msra.mxu0 1.0
          %951 = vmatprep.subr.mxu0 0.0
          %952 = vmatpush1.msra.mxu0 1.0
          %953 = vmatprep.subr.mxu0 0.0
          %954 = vmatpush1.msra.mxu0 1.0
          %955 = vmatprep.subr.mxu0 0.0
          %956 = vmatpush1.msra.mxu0 1.0
          %957 = vmatprep.subr.mxu0 0.0
          %958 = vmatpush1.msra.mxu0 1.0
          %959 = vmatprep.subr.mxu0 0.0
          %960 = vmatpush1.msra.mxu0 1.0
          %961 = vmatprep.subr.mxu0 0.0
          %962 = vmatpush1.msra.mxu0 1.0
          %963 = vmatprep.subr.mxu0 0.0
          %964 = vmatpush1.msra.mxu0 1.0
          %965 = vmatprep.subr.mxu0 0.0
          %966 = vmatpush1.msra.mxu0 1.0
          %967 = vmatprep.subr.mxu0 0.0
          %968 = vmatpush1.msra.mxu0 1.0
          %969 = vmatprep.subr.mxu0 0.0
          %970 = vmatpush2.msra.mxu0 0.0
          %971 = vmatprep.subr.mxu0 0.0
          %972 = vmatpush2.msra.mxu0 0.0
          %973 = vmatprep.subr.mxu0 0.0
          %974 = vmatpush2.msra.mxu0 0.0
          %975 = vmatprep.subr.mxu0 0.0
          %976 = vmatpush2.msra.mxu0 0.0
          %977 = vmatprep.subr.mxu0 0.0
          %978 = vmatpush2.msra.mxu0 0.0
          %979 = vmatprep.subr.mxu0 0.0
          %980 = vmatpush2.msra.mxu0 0.0
          %981 = vmatprep.subr.mxu0 0.0
          %982 = vmatpush2.msra.mxu0 0.0
          %983 = vmatprep.subr.mxu0 0.0
          %984 = vmatpush2.msra.mxu0 0.0
          %985 = vmatprep.subr.mxu0 0.0
          %986 = vmatpush2.msra.mxu0 0.0
          %987 = vmatprep.subr.mxu0 0.0
          %988 = vmatpush2.msra.mxu0 0.0
          %989 = vmatprep.subr.mxu0 0.0
          %990 = vmatpush2.msra.mxu0 0.0
          %991 = vmatprep.subr.mxu0 0.0
          %992 = vmatpush2.msra.mxu0 0.0
          %993 = vmatprep.subr.mxu0 0.0
          %994 = vmatpush2.msra.mxu0 0.0
          %995 = vmatprep.subr.mxu0 0.0
          %996 = vmatpush2.msra.mxu0 0.0
          %997 = vmatprep.subr.mxu0 0.0
          %998 = vmatpush2.msra.mxu0 0.0
          %999 = vmatprep.subr.mxu0 0.0
          %1000 = vmatpush2.msra.mxu0 0.0
          %1001 = vmatprep.mubr.f32.mxu0 0.0
          %v1002 = vand.u32 %v935, 4294901760
          %v1003 = vsub.f32 %v935, %v1002
          %v1004 = vand.u32 %v1003, 4294901760
          %v1005 = vsub.f32 %v1003, %v1004
          %v1006 = vand.u32 %v1005, 4294901760
          %1007 = vmatmul.mubr.f32.gmra.mxu0 %v1006
          %v1008 = vpop.f32.mrf.mxu0
          %v1009 = vadd.f32 0.0, %v1008
          %v1010 = vpop.f32.mrf.mxu0
          %1011 = vmatprep.mubr.f32.mxu0 0.0
          %v1012 = vand.u32 %v936, 4294901760
          %v1013 = vsub.f32 %v936, %v1012
          %v1014 = vand.u32 %v1013, 4294901760
          %v1015 = vsub.f32 %v1013, %v1014
          %v1016 = vand.u32 %v1015, 4294901760
          %1017 = vmatmul.mubr.f32.gmra.mxu0 %v1016
          %v1018 = vpop.f32.mrf.mxu0
          %v1019 = vadd.f32 0.0, %v1018
          %v1020 = vpop.f32.mrf.mxu0
          %1021 = vdwg.mxu0
          %1022 = vmatprep.subr.mxu0 0.0
          %1023 = vmatpush1.msra.mxu0 0.0
          %1024 = vmatprep.subr.mxu0 0.0
          %1025 = vmatpush1.msra.mxu0 0.0
          %1026 = vmatprep.subr.mxu0 0.0
          %1027 = vmatpush1.msra.mxu0 0.0
          %1028 = vmatprep.subr.mxu0 0.0
          %1029 = vmatpush1.msra.mxu0 0.0
          %1030 = vmatprep.subr.mxu0 0.0
          %1031 = vmatpush1.msra.mxu0 0.0
          %1032 = vmatprep.subr.mxu0 0.0
          %1033 = vmatpush1.msra.mxu0 0.0
          %1034 = vmatprep.subr.mxu0 0.0
          %1035 = vmatpush1.msra.mxu0 0.0
          %1036 = vmatprep.subr.mxu0 0.0
          %1037 = vmatpush1.msra.mxu0 0.0
          %1038 = vmatprep.subr.mxu0 0.0
          %1039 = vmatpush1.msra.mxu0 0.0
          %1040 = vmatprep.subr.mxu0 0.0
          %1041 = vmatpush1.msra.mxu0 0.0
          %1042 = vmatprep.subr.mxu0 0.0
          %1043 = vmatpush1.msra.mxu0 0.0
          %1044 = vmatprep.subr.mxu0 0.0
          %1045 = vmatpush1.msra.mxu0 0.0
          %1046 = vmatprep.subr.mxu0 0.0
          %1047 = vmatpush1.msra.mxu0 0.0
          %1048 = vmatprep.subr.mxu0 0.0
          %1049 = vmatpush1.msra.mxu0 0.0
          %1050 = vmatprep.subr.mxu0 0.0
          %1051 = vmatpush1.msra.mxu0 0.0
          %1052 = vmatprep.subr.mxu0 0.0
          %1053 = vmatpush1.msra.mxu0 0.0
          %1054 = vmatprep.subr.mxu0 0.0
          %1055 = vmatpush2.msra.mxu0 0.0
          %1056 = vmatprep.subr.mxu0 0.0
          %1057 = vmatpush2.msra.mxu0 0.0
          %1058 = vmatprep.subr.mxu0 0.0
          %1059 = vmatpush2.msra.mxu0 0.0
          %1060 = vmatprep.subr.mxu0 0.0
          %1061 = vmatpush2.msra.mxu0 0.0
          %1062 = vmatprep.subr.mxu0 0.0
          %1063 = vmatpush2.msra.mxu0 0.0
          %1064 = vmatprep.subr.mxu0 0.0
          %1065 = vmatpush2.msra.mxu0 0.0
          %1066 = vmatprep.subr.mxu0 0.0
          %1067 = vmatpush2.msra.mxu0 0.0
          %1068 = vmatprep.subr.mxu0 0.0
          %1069 = vmatpush2.msra.mxu0 0.0
          %1070 = vmatprep.subr.mxu0 0.0
          %1071 = vmatpush2.msra.mxu0 0.0
          %1072 = vmatprep.subr.mxu0 0.0
          %1073 = vmatpush2.msra.mxu0 0.0
          %1074 = vmatprep.subr.mxu0 0.0
          %1075 = vmatpush2.msra.mxu0 0.0
          %1076 = vmatprep.subr.mxu0 0.0
          %1077 = vmatpush2.msra.mxu0 0.0
          %1078 = vmatprep.subr.mxu0 0.0
          %1079 = vmatpush2.msra.mxu0 0.0
          %1080 = vmatprep.subr.mxu0 0.0
          %1081 = vmatpush2.msra.mxu0 0.0
          %1082 = vmatprep.subr.mxu0 0.0
          %1083 = vmatpush2.msra.mxu0 0.0
          %1084 = vmatprep.subr.mxu0 0.0
          %1085 = vmatpush2.msra.mxu0 0.0
          %1086 = vmatprep.mubr.f32.mxu0 0.0
          %v1087 = vand.u32 %v935, 4294901760
          %1088 = vmatmul.mubr.f32.gmra.mxu0 %v1087
          %v1089 = vpop.f32.mrf.mxu0
          %v1090 = vadd.f32 %v1009, %v1089
          %v1091 = vpop.f32.mrf.mxu0
          %1092 = vmatprep.mubr.f32.mxu0 0.0
          %v1093 = vand.u32 %v936, 4294901760
          %1094 = vmatmul.mubr.f32.gmra.mxu0 %v1093
          %v1095 = vpop.f32.mrf.mxu0
          %v1096 = vadd.f32 %v1019, %v1095
          %v1097 = vpop.f32.mrf.mxu0
          %1098 = vdwg.mxu0
          %1099 = vmatprep.subr.mxu0 0.0
          %1100 = vmatpush1.msra.mxu0 0.0
          %1101 = vmatprep.subr.mxu0 0.0
          %1102 = vmatpush1.msra.mxu0 0.0
          %1103 = vmatprep.subr.mxu0 0.0
          %1104 = vmatpush1.msra.mxu0 0.0
          %1105 = vmatprep.subr.mxu0 0.0
          %1106 = vmatpush1.msra.mxu0 0.0
          %1107 = vmatprep.subr.mxu0 0.0
          %1108 = vmatpush1.msra.mxu0 0.0
          %1109 = vmatprep.subr.mxu0 0.0
          %1110 = vmatpush1.msra.mxu0 0.0
          %1111 = vmatprep.subr.mxu0 0.0
          %1112 = vmatpush1.msra.mxu0 0.0
          %1113 = vmatprep.subr.mxu0 0.0
          %1114 = vmatpush1.msra.mxu0 0.0
          %1115 = vmatprep.subr.mxu0 0.0
          %1116 = vmatpush1.msra.mxu0 0.0
          %1117 = vmatprep.subr.mxu0 0.0
          %1118 = vmatpush1.msra.mxu0 0.0
          %1119 = vmatprep.subr.mxu0 0.0
          %1120 = vmatpush1.msra.mxu0 0.0
          %1121 = vmatprep.subr.mxu0 0.0
          %1122 = vmatpush1.msra.mxu0 0.0
          %1123 = vmatprep.subr.mxu0 0.0
          %1124 = vmatpush1.msra.mxu0 0.0
          %1125 = vmatprep.subr.mxu0 0.0
          %1126 = vmatpush1.msra.mxu0 0.0
          %1127 = vmatprep.subr.mxu0 0.0
          %1128 = vmatpush1.msra.mxu0 0.0
          %1129 = vmatprep.subr.mxu0 0.0
          %1130 = vmatpush1.msra.mxu0 0.0
          %1131 = vmatprep.subr.mxu0 0.0
          %1132 = vmatpush2.msra.mxu0 0.0
          %1133 = vmatprep.subr.mxu0 0.0
          %1134 = vmatpush2.msra.mxu0 0.0
          %1135 = vmatprep.subr.mxu0 0.0
          %1136 = vmatpush2.msra.mxu0 0.0
          %1137 = vmatprep.subr.mxu0 0.0
          %1138 = vmatpush2.msra.mxu0 0.0
          %1139 = vmatprep.subr.mxu0 0.0
          %1140 = vmatpush2.msra.mxu0 0.0
          %1141 = vmatprep.subr.mxu0 0.0
          %1142 = vmatpush2.msra.mxu0 0.0
          %1143 = vmatprep.subr.mxu0 0.0
          %1144 = vmatpush2.msra.mxu0 0.0
          %1145 = vmatprep.subr.mxu0 0.0
          %1146 = vmatpush2.msra.mxu0 0.0
          %1147 = vmatprep.subr.mxu0 0.0
          %1148 = vmatpush2.msra.mxu0 0.0
          %1149 = vmatprep.subr.mxu0 0.0
          %1150 = vmatpush2.msra.mxu0 0.0
          %1151 = vmatprep.subr.mxu0 0.0
          %1152 = vmatpush2.msra.mxu0 0.0
          %1153 = vmatprep.subr.mxu0 0.0
          %1154 = vmatpush2.msra.mxu0 0.0
          %1155 = vmatprep.subr.mxu0 0.0
          %1156 = vmatpush2.msra.mxu0 0.0
          %1157 = vmatprep.subr.mxu0 0.0
          %1158 = vmatpush2.msra.mxu0 0.0
          %1159 = vmatprep.subr.mxu0 0.0
          %1160 = vmatpush2.msra.mxu0 0.0
          %1161 = vmatprep.subr.mxu0 0.0
          %1162 = vmatpush2.msra.mxu0 0.0
          %1163 = vmatprep.mubr.f32.mxu0 0.0
          %v1164 = vand.u32 %v935, 4294901760
          %v1165 = vsub.f32 %v935, %v1164
          %1166 = vmatmul.mubr.f32.gmra.mxu0 %v1165
          %v1167 = vpop.f32.mrf.mxu0
          %v1168 = vadd.f32 %v1090, %v1167
          %v1169 = vpop.f32.mrf.mxu0
          %1170 = vmatprep.mubr.f32.mxu0 0.0
          %v1171 = vand.u32 %v936, 4294901760
          %v1172 = vsub.f32 %v936, %v1171
          %1173 = vmatmul.mubr.f32.gmra.mxu0 %v1172
          %v1174 = vpop.f32.mrf.mxu0
          %v1175 = vadd.f32 %v1096, %v1174
          %v1176 = vpop.f32.mrf.mxu0
          %1177 = vdwg.mxu0
          %1178 = vmatprep.subr.mxu0 0.0
          %1179 = vmatpush1.msra.mxu0 1.0
          %1180 = vmatprep.subr.mxu0 0.0
          %1181 = vmatpush1.msra.mxu0 1.0
          %1182 = vmatprep.subr.mxu0 0.0
          %1183 = vmatpush1.msra.mxu0 1.0
          %1184 = vmatprep.subr.mxu0 0.0
          %1185 = vmatpush1.msra.mxu0 1.0
          %1186 = vmatprep.subr.mxu0 0.0
          %1187 = vmatpush1.msra.mxu0 1.0
          %1188 = vmatprep.subr.mxu0 0.0
          %1189 = vmatpush1.msra.mxu0 1.0
          %1190 = vmatprep.subr.mxu0 0.0
          %1191 = vmatpush1.msra.mxu0 1.0
          %1192 = vmatprep.subr.mxu0 0.0
          %1193 = vmatpush1.msra.mxu0 1.0
          %1194 = vmatprep.subr.mxu0 0.0
          %1195 = vmatpush1.msra.mxu0 1.0
          %1196 = vmatprep.subr.mxu0 0.0
          %1197 = vmatpush1.msra.mxu0 1.0
          %1198 = vmatprep.subr.mxu0 0.0
          %1199 = vmatpush1.msra.mxu0 1.0
          %1200 = vmatprep.subr.mxu0 0.0
          %1201 = vmatpush1.msra.mxu0 1.0
          %1202 = vmatprep.subr.mxu0 0.0
          %1203 = vmatpush1.msra.mxu0 1.0
          %1204 = vmatprep.subr.mxu0 0.0
          %1205 = vmatpush1.msra.mxu0 1.0
          %1206 = vmatprep.subr.mxu0 0.0
          %1207 = vmatpush1.msra.mxu0 1.0
          %1208 = vmatprep.subr.mxu0 0.0
          %1209 = vmatpush1.msra.mxu0 1.0
          %1210 = vmatprep.subr.mxu0 0.0
          %1211 = vmatpush2.msra.mxu0 0.0
          %1212 = vmatprep.subr.mxu0 0.0
          %1213 = vmatpush2.msra.mxu0 0.0
          %1214 = vmatprep.subr.mxu0 0.0
          %1215 = vmatpush2.msra.mxu0 0.0
          %1216 = vmatprep.subr.mxu0 0.0
          %1217 = vmatpush2.msra.mxu0 0.0
          %1218 = vmatprep.subr.mxu0 0.0
          %1219 = vmatpush2.msra.mxu0 0.0
          %1220 = vmatprep.subr.mxu0 0.0
          %1221 = vmatpush2.msra.mxu0 0.0
          %1222 = vmatprep.subr.mxu0 0.0
          %1223 = vmatpush2.msra.mxu0 0.0
          %1224 = vmatprep.subr.mxu0 0.0
          %1225 = vmatpush2.msra.mxu0 0.0
          %1226 = vmatprep.subr.mxu0 0.0
          %1227 = vmatpush2.msra.mxu0 0.0
          %1228 = vmatprep.subr.mxu0 0.0
          %1229 = vmatpush2.msra.mxu0 0.0
          %1230 = vmatprep.subr.mxu0 0.0
          %1231 = vmatpush2.msra.mxu0 0.0
          %1232 = vmatprep.subr.mxu0 0.0
          %1233 = vmatpush2.msra.mxu0 0.0
          %1234 = vmatprep.subr.mxu0 0.0
          %1235 = vmatpush2.msra.mxu0 0.0
          %1236 = vmatprep.subr.mxu0 0.0
          %1237 = vmatpush2.msra.mxu0 0.0
          %1238 = vmatprep.subr.mxu0 0.0
          %1239 = vmatpush2.msra.mxu0 0.0
          %1240 = vmatprep.subr.mxu0 0.0
          %1241 = vmatpush2.msra.mxu0 0.0
          %1242 = vmatprep.mubr.f32.mxu0 0.0
          %v1243 = vand.u32 %v935, 4294901760
          %v1244 = vsub.f32 %v935, %v1243
          %v1245 = vand.u32 %v1244, 4294901760
          %1246 = vmatmul.mubr.f32.gmra.mxu0 %v1245
          %v1247 = vpop.f32.mrf.mxu0
          %v1248 = vadd.f32 %v1168, %v1247
          %v1249 = vpop.f32.mrf.mxu0
          %1250 = vmatprep.mubr.f32.mxu0 0.0
          %v1251 = vand.u32 %v936, 4294901760
          %v1252 = vsub.f32 %v936, %v1251
          %v1253 = vand.u32 %v1252, 4294901760
          %1254 = vmatmul.mubr.f32.gmra.mxu0 %v1253
          %v1255 = vpop.f32.mrf.mxu0
          %v1256 = vadd.f32 %v1175, %v1255
          %v1257 = vpop.f32.mrf.mxu0
          %1258 = vdwg.mxu0
          %1259 = vmatprep.subr.mxu0 0.0
          %1260 = vmatpush1.msra.mxu0 0.0
          %1261 = vmatprep.subr.mxu0 0.0
          %1262 = vmatpush1.msra.mxu0 0.0
          %1263 = vmatprep.subr.mxu0 0.0
          %1264 = vmatpush1.msra.mxu0 0.0
          %1265 = vmatprep.subr.mxu0 0.0
          %1266 = vmatpush1.msra.mxu0 0.0
          %1267 = vmatprep.subr.mxu0 0.0
          %1268 = vmatpush1.msra.mxu0 0.0
          %1269 = vmatprep.subr.mxu0 0.0
          %1270 = vmatpush1.msra.mxu0 0.0
          %1271 = vmatprep.subr.mxu0 0.0
          %1272 = vmatpush1.msra.mxu0 0.0
          %1273 = vmatprep.subr.mxu0 0.0
          %1274 = vmatpush1.msra.mxu0 0.0
          %1275 = vmatprep.subr.mxu0 0.0
          %1276 = vmatpush1.msra.mxu0 0.0
          %1277 = vmatprep.subr.mxu0 0.0
          %1278 = vmatpush1.msra.mxu0 0.0
          %1279 = vmatprep.subr.mxu0 0.0
          %1280 = vmatpush1.msra.mxu0 0.0
          %1281 = vmatprep.subr.mxu0 0.0
          %1282 = vmatpush1.msra.mxu0 0.0
          %1283 = vmatprep.subr.mxu0 0.0
          %1284 = vmatpush1.msra.mxu0 0.0
          %1285 = vmatprep.subr.mxu0 0.0
          %1286 = vmatpush1.msra.mxu0 0.0
          %1287 = vmatprep.subr.mxu0 0.0
          %1288 = vmatpush1.msra.mxu0 0.0
          %1289 = vmatprep.subr.mxu0 0.0
          %1290 = vmatpush1.msra.mxu0 0.0
          %1291 = vmatprep.subr.mxu0 0.0
          %1292 = vmatpush2.msra.mxu0 0.0
          %1293 = vmatprep.subr.mxu0 0.0
          %1294 = vmatpush2.msra.mxu0 0.0
          %1295 = vmatprep.subr.mxu0 0.0
          %1296 = vmatpush2.msra.mxu0 0.0
          %1297 = vmatprep.subr.mxu0 0.0
          %1298 = vmatpush2.msra.mxu0 0.0
          %1299 = vmatprep.subr.mxu0 0.0
          %1300 = vmatpush2.msra.mxu0 0.0
          %1301 = vmatprep.subr.mxu0 0.0
          %1302 = vmatpush2.msra.mxu0 0.0
          %1303 = vmatprep.subr.mxu0 0.0
          %1304 = vmatpush2.msra.mxu0 0.0
          %1305 = vmatprep.subr.mxu0 0.0
          %1306 = vmatpush2.msra.mxu0 0.0
          %1307 = vmatprep.subr.mxu0 0.0
          %1308 = vmatpush2.msra.mxu0 0.0
          %1309 = vmatprep.subr.mxu0 0.0
          %1310 = vmatpush2.msra.mxu0 0.0
          %1311 = vmatprep.subr.mxu0 0.0
          %1312 = vmatpush2.msra.mxu0 0.0
          %1313 = vmatprep.subr.mxu0 0.0
          %1314 = vmatpush2.msra.mxu0 0.0
          %1315 = vmatprep.subr.mxu0 0.0
          %1316 = vmatpush2.msra.mxu0 0.0
          %1317 = vmatprep.subr.mxu0 0.0
          %1318 = vmatpush2.msra.mxu0 0.0
          %1319 = vmatprep.subr.mxu0 0.0
          %1320 = vmatpush2.msra.mxu0 0.0
          %1321 = vmatprep.subr.mxu0 0.0
          %1322 = vmatpush2.msra.mxu0 0.0
          %1323 = vmatprep.mubr.f32.mxu0 0.0
          %v1324 = vand.u32 %v935, 4294901760
          %1325 = vmatmul.mubr.f32.gmra.mxu0 %v1324
          %v1326 = vpop.f32.mrf.mxu0
          %v1327 = vadd.f32 %v1248, %v1326
          %v1328 = vpop.f32.mrf.mxu0
          %1329 = vmatprep.mubr.f32.mxu0 0.0
          %v1330 = vand.u32 %v936, 4294901760
          %1331 = vmatmul.mubr.f32.gmra.mxu0 %v1330
          %v1332 = vpop.f32.mrf.mxu0
          %v1333 = vadd.f32 %v1256, %v1332
          %v1334 = vpop.f32.mrf.mxu0
          %1335 = vdwg.mxu0
          %1336 = vmatprep.subr.mxu0 0.0
          %1337 = vmatpush1.msra.mxu0 1.0
          %1338 = vmatprep.subr.mxu0 0.0
          %1339 = vmatpush1.msra.mxu0 1.0
          %1340 = vmatprep.subr.mxu0 0.0
          %1341 = vmatpush1.msra.mxu0 1.0
          %1342 = vmatprep.subr.mxu0 0.0
          %1343 = vmatpush1.msra.mxu0 1.0
          %1344 = vmatprep.subr.mxu0 0.0
          %1345 = vmatpush1.msra.mxu0 1.0
          %1346 = vmatprep.subr.mxu0 0.0
          %1347 = vmatpush1.msra.mxu0 1.0
          %1348 = vmatprep.subr.mxu0 0.0
          %1349 = vmatpush1.msra.mxu0 1.0
          %1350 = vmatprep.subr.mxu0 0.0
          %1351 = vmatpush1.msra.mxu0 1.0
          %1352 = vmatprep.subr.mxu0 0.0
          %1353 = vmatpush1.msra.mxu0 1.0
          %1354 = vmatprep.subr.mxu0 0.0
          %1355 = vmatpush1.msra.mxu0 1.0
          %1356 = vmatprep.subr.mxu0 0.0
          %1357 = vmatpush1.msra.mxu0 1.0
          %1358 = vmatprep.subr.mxu0 0.0
          %1359 = vmatpush1.msra.mxu0 1.0
          %1360 = vmatprep.subr.mxu0 0.0
          %1361 = vmatpush1.msra.mxu0 1.0
          %1362 = vmatprep.subr.mxu0 0.0
          %1363 = vmatpush1.msra.mxu0 1.0
          %1364 = vmatprep.subr.mxu0 0.0
          %1365 = vmatpush1.msra.mxu0 1.0
          %1366 = vmatprep.subr.mxu0 0.0
          %1367 = vmatpush1.msra.mxu0 1.0
          %1368 = vmatprep.subr.mxu0 0.0
          %1369 = vmatpush2.msra.mxu0 0.0
          %1370 = vmatprep.subr.mxu0 0.0
          %1371 = vmatpush2.msra.mxu0 0.0
          %1372 = vmatprep.subr.mxu0 0.0
          %1373 = vmatpush2.msra.mxu0 0.0
          %1374 = vmatprep.subr.mxu0 0.0
          %1375 = vmatpush2.msra.mxu0 0.0
          %1376 = vmatprep.subr.mxu0 0.0
          %1377 = vmatpush2.msra.mxu0 0.0
          %1378 = vmatprep.subr.mxu0 0.0
          %1379 = vmatpush2.msra.mxu0 0.0
          %1380 = vmatprep.subr.mxu0 0.0
          %1381 = vmatpush2.msra.mxu0 0.0
          %1382 = vmatprep.subr.mxu0 0.0
          %1383 = vmatpush2.msra.mxu0 0.0
          %1384 = vmatprep.subr.mxu0 0.0
          %1385 = vmatpush2.msra.mxu0 0.0
          %1386 = vmatprep.subr.mxu0 0.0
          %1387 = vmatpush2.msra.mxu0 0.0
          %1388 = vmatprep.subr.mxu0 0.0
          %1389 = vmatpush2.msra.mxu0 0.0
          %1390 = vmatprep.subr.mxu0 0.0
          %1391 = vmatpush2.msra.mxu0 0.0
          %1392 = vmatprep.subr.mxu0 0.0
          %1393 = vmatpush2.msra.mxu0 0.0
          %1394 = vmatprep.subr.mxu0 0.0
          %1395 = vmatpush2.msra.mxu0 0.0
          %1396 = vmatprep.subr.mxu0 0.0
          %1397 = vmatpush2.msra.mxu0 0.0
          %1398 = vmatprep.subr.mxu0 0.0
          %1399 = vmatpush2.msra.mxu0 0.0
          %1400 = vmatprep.mubr.f32.mxu0 0.0
          %v1401 = vand.u32 %v935, 4294901760
          %1402 = vmatmul.mubr.f32.gmra.mxu0 %v1401
          %v1403 = vpop.f32.mrf.mxu0
          %v1404 = vadd.f32 %v1327, %v1403
          %v1405 = vpop.f32.mrf.mxu0
          %1406 = vmatprep.mubr.f32.mxu0 0.0
          %v1407 = vand.u32 %v936, 4294901760
          %1408 = vmatmul.mubr.f32.gmra.mxu0 %v1407
          %v1409 = vpop.f32.mrf.mxu0
          %v1410 = vadd.f32 %v1333, %v1409
          %v1411 = vpop.f32.mrf.mxu0
          %1412 = vdwg.mxu0
          %v1413 = vrsqrt.pop %v1404
          %v1414 = vmul.f32 %v1404, %v1413
          %vm1415 = vcmp.eq.f32.partialorder %v1404, inf
          %v1416 = vsel %vm1415, %v1404, %v1414
          %vm1417 = vcmp.eq.f32.partialorder %v1404, 0.0
          %v1418 = vand.u32 %v1404, 2147483648
          %v1419 = vsel %vm1417, %v1418, %v1416
          %v1420 = vrsqrt.pop %v1410
          %v1421 = vmul.f32 %v1410, %v1420
          %vm1422 = vcmp.eq.f32.partialorder %v1410, inf
          %v1423 = vsel %vm1422, %v1410, %v1421
          %vm1424 = vcmp.eq.f32.partialorder %v1410, 0.0
          %v1425 = vand.u32 %v1410, 2147483648
          %v1426 = vsel %vm1424, %v1425, %v1423
          %v1427 = vsub.f32 2.0, %v1419
          %v1428 = vsub.f32 2.0, %v1426
          %v1429 = vmax.f32 %v1427, 0.0
          %v1430 = vmax.f32 %v1428, 0.0
          %v1431 = vmul.f32 %v1429, %v1429
          %v1432 = vmul.f32 %v1430, %v1430
          %v1433 = vsub.f32 %v1431, %v1404
          %v1434 = vsub.f32 %v1432, %v1410
          %1436 = vset.pattern.permute.xlu0 0
          %1437 = vperm.xlu0 %1436, %v929
          %v1438 = vpop.permute.xlu0 %1437
          %1441 = vset.pattern.permute.xlu0 0
          %1442 = vperm.xlu0 %1441, %v930
          %v1443 = vpop.permute.xlu0 %1442
          %v1445 = vmul.f32 %v1438, %v1433
          %v1446 = vmul.f32 %v1443, %v1434
          %v1447 = vadd.f32 %v1404, %v1445
          %v1448 = vadd.f32 %v1410, %v1446
          %s1449 = smul.u32 %s366, 16
          %s1450 = sadd.s32 %s1449, 0
          %v1451 = vlaneseq
          %v1452 = vshrl.u32 %v1451, 7
          %v1453 = vadd.s32 %v1452, 8
          %v1454 = vstv %s1450
          %v1455 = vadd.s32 %v1454, %v1452
          %v1456 = vadd.s32 %v1454, %v1453
          %vm1457 = vcmp.lt.s32.totalorder %v1455, 36
          %vm1458 = vcmp.lt.s32.totalorder %v1456, 36
          %v1459 = vsel %vm1457, 1, 0
          %v1460 = vsel %vm1458, 1, 0
          %vm1461 = vcmp.eq.s32.totalorder %v1459, 1
          %vm1462 = vcmp.eq.s32.totalorder %v1460, 1
          %v1463 = vsel %vm1461, %v1447, 0.0
          %v1464 = vsel %vm1462, %v1448, 0.0
          %v1465 = vadd.f32 %v1463, %v1464
          %1466 = vadd.xlane.f32.xlu0 %v1465
          %v1467 = vpop.xlane.xlu0 %1466
          %v1468 = vrot.slane %v1467, 4
          %v1469 = vadd.f32 %v1467, %v1468
          %v1470 = vrot.slane %v1469, 2
          %v1471 = vadd.f32 %v1469, %v1470
          %v1472 = vrot.slane %v1471, 1
          %v1473 = vadd.f32 %v1471, %v1472
          %s1474 = vtos %v1473
          %s1475 = sadd.f32 %s1474, 0.0
          %s1476 = smul.f32 %s1475, 0.0078125
          %v1477 = vstv %s1476
          %v1478 = vadd.f32 %v922, %v1477
          %1479 = vst [vmem:[%s324] sm:$0xff] %v1478
        $region52: #{tpu_custom_call.1} parent=31 // pred_fallthru
          _
        %s1480 = sand.u32 %s145, 1
        %s1481 = scalar_lea.sflag [#allocation4], %s1480
        %s1482 = sand.u32 %s145, 1
        %s1483 = smul.addr %s1482, 8
        %s1484 = scalar_lea.vmem [#allocation7], %s1483
        // Predicated region
        $region53: #{tpu_custom_call.1} parent=31 // pred_check
          %p1485 = pneg %p155
        $region54: #{tpu_custom_call.1} parent=31 // pred_check_branch
          %1487 = sbr.rel (%p1485) target = $region56
        $region55: #{tpu_custom_call.1} parent=31 // pred_region
          %s1489 = ssub.s32 128, 128
          %1490 = vsyncadd %s1481, %s1489
          %s1491 = smul.addr %s27, 128
          %s1492 = scalar_lea.hbm %s3, %s1491
          %s1494 = sshll.u32 %s1484, 4
          %s1495 = int_to_ptr.vmem [resolvable:$true] %s1494
          %1497 = dma.vmem_to_hbm [thread:$0]  %s1495, 128, %s1492, %s1481
        $region56: #{tpu_custom_call.1} parent=31 // pred_fallthru
          _
      $region32: #{tpu_custom_call.1} parent=5 // pred_fallthru
        _
      %p1498 = scmp.le.s32.totalorder 2, %s18
      // Predicated region
      $region57: #{tpu_custom_call.1} parent=5 // pred_check
        %p1499 = pneg %p1498
      $region58: #{tpu_custom_call.1} parent=5 // pred_check_branch
        %1501 = sbr.rel (%p1499) target = $region60
      $region59: #{tpu_custom_call.1} parent=5 // pred_region
        %s1502 = ssub.s32 %s18, 2
        // Predicated region
        $region61: #{tpu_custom_call.1} parent=59 // pred_check
          %p1503 = pneg %p161
        $region62: #{tpu_custom_call.1} parent=59 // pred_check_branch
          %1505 = sbr.rel (%p1503) target = $region64
        $region63: #{tpu_custom_call.1} parent=59 // pred_region
          %s1506 = sand.u32 %s146, 1
          %s1507 = scalar_lea.sflag [#allocation4], %s1506
          %s1508 = sand.u32 %s146, 1
          %s1509 = smul.addr %s1508, 8
          %s1510 = scalar_lea.vmem [#allocation7], %s1509
          %1511 = dma.done %s1507, 128
        $region64: #{tpu_custom_call.1} parent=59 // pred_fallthru
          _
      $region60: #{tpu_custom_call.1} parent=5 // pred_fallthru
        _
    $region6: #{tpu_custom_call.1} parent=1 // loop_footer
      %s22 = sadd.s32 1, %s18
    $region7: #{tpu_custom_call.1} parent=1 // loop_footer_branch
      %17 = sbr.rel target = $region3
    $region8: #{tpu_custom_call.1} parent=1 // loop_exit
      _
    %1512 = vsyncpa [#allocation3], 1
    %s1513 = scalar_lea.sflag [#allocation3], 1
    %1514 = vsyncpa %s1513, 1
    %1515 = vsyncpa [#allocation6], 1
    %s1516 = scalar_lea.sflag [#allocation6], 1
    %1517 = vsyncpa %s1516, 1
    %1518 = vsyncpa [#allocation4], 1
    %s1519 = scalar_lea.sflag [#allocation4], 1
    %1520 = vsyncpa %s1519, 1

</llo_original>
